<compile_context>
chip_gen: v6e
topology: v6e:2x2x1
jax: 0.10.0
libtpu: 0.0.40
codegen_flags: <defaults>
</compile_context>

<pallas_src>
import jax
import jax.numpy as jnp
from jax.experimental import pallas as pl
from jax.experimental.pallas import tpu as pltpu

N_INPUT = 6
N_HIDDEN = 64
N_LAYERS = 2     # hard-coded as two explicit stacked LSTM cells below
N_OUTPUT = 21


# ---------------------------------------------------------------------------
# Pallas kernel: the sequential 2-layer LSTM recurrence, layer by layer.
#   xproj0_ref : (T, B, 4H)  precomputed x_t @ W_ih0 + b0   (gate order [i,f,o,g])
#   w_hh0_ref  : (H, 4H)     layer-0 recurrent weights       (reordered gates)
#   w_ih1_ref  : (H, 4H)     layer-1 input weights           (reordered gates)
#   w_hh1_ref  : (H, 4H)     layer-1 recurrent weights       (reordered gates)
#   b1_ref     : (1, 4H)     layer-1 bias (b_ih1 + b_hh1, reordered gates)
#   h1_ref     : (B, T*H)    output: layer-1 hidden states, step t at lanes
#                            [t*H:(t+1)*H]  (single lane-dense store)
# ---------------------------------------------------------------------------
def lstm_recurrence_kernel(xproj0_ref, w_hh0_ref, w_ih1_ref, w_hh1_ref,
                           b1_ref, h1_ref):
    T, B, G = xproj0_ref.shape           # G = 4 * H
    H = G // 4

    w_hh0 = w_hh0_ref[...]               # (H, 4H)
    w_ih1 = w_ih1_ref[...]               # (H, 4H)
    w_hh1 = w_hh1_ref[...]               # (H, 4H)

    def gate(gates, c):
        # gate order [i, f, o, g]: one sigmoid over the first 3H lanes,
        # one tanh over the last H lanes (2 EUP calls per cell).
        ifo = jax.nn.sigmoid(gates[:, : 3 * H])
        g = jnp.tanh(gates[:, 3 * H:])
        i = ifo[:, 0 * H:1 * H]
        f = ifo[:, 1 * H:2 * H]
        o = ifo[:, 2 * H:3 * H]
        c_new = f * c + i * g
        h_new = o * jnp.tanh(c_new)
        return h_new, c_new

    # ---- layer 0 recurrence -------------------------------------------------
    # Per-step critical path: one (B,H)@(H,4H) MXU push + one gate block.
    # h0 per step stays in registers (no per-step VMEM store).
    h0 = jnp.zeros((B, H), jnp.float32)
    c0 = jnp.zeros((B, H), jnp.float32)
    h0_steps = []
    for t in range(T):                    # T static & small -> fully unrolled
        gates0 = xproj0_ref[t] + jnp.dot(
            h0, w_hh0, preferred_element_type=jnp.float32)
        h0, c0 = gate(gates0, c0)
        h0_steps.append(h0)

    # ---- hoisted layer-1 input projection ------------------------------------
    # One sublane/lane-dense (T*B, H) @ (H, 4H) MXU push replaces T small
    # M=B pushes on the layer-1 serial spine; b1 is folded in here once.
    h0_seq = jnp.concatenate(h0_steps, axis=0)                     # (T*B, H)
    b1 = jnp.broadcast_to(b1_ref[...], (T * B, G))                 # hoisted bcast
    xproj1 = jnp.dot(h0_seq, w_ih1,
                     preferred_element_type=jnp.float32) + b1      # (T*B, 4H)

    # ---- layer 1 recurrence -------------------------------------------------
    # Per-step critical path: one (B,H)@(H,4H) MXU push + one gate block.
    h1 = jnp.zeros((B, H), jnp.float32)
    c1 = jnp.zeros((B, H), jnp.float32)
    h1_steps = []
    for t in range(T):
        gates1 = xproj1[t * B:(t + 1) * B] + jnp.dot(
            h1, w_hh1, preferred_element_type=jnp.float32)
        h1, c1 = gate(gates1, c1)
        h1_steps.append(h1)

    # ---- single lane-dense output store: (B, T*H) = (2, 512) ----------------
    h1_ref[...] = jnp.concatenate(h1_steps, axis=1)

    # TODO(synk): on v6e/v7x, cast the dot operands above to bf16 (f32 accum &
    # gate math) and/or drive the MXU weight-stationary via
    # pltpu.matmul_push_rhs/acc_lhs/pop to amortize the RHS load over T steps.


# ---------------------------------------------------------------------------
# Parameter layout helpers (wrapper side).
# ---------------------------------------------------------------------------
def _reorder_ifgo_to_ifog(w):
    """Reorder the last dim's gate blocks from PyTorch [i,f,g,o] to [i,f,o,g]."""
    H = N_HIDDEN
    i = w[..., 0 * H:1 * H]
    f = w[..., 1 * H:2 * H]
    g = w[..., 2 * H:3 * H]
    o = w[..., 3 * H:4 * H]
    return jnp.concatenate([i, f, o, g], axis=-1)


def rnn_forward(x, params):
    """x: (B, T, n_input) float32 -> (B, T, n_output) float32 (batch_first)."""
    B, T, _ = x.shape
    H = N_HIDDEN
    G = 4 * H

    # --- gate reorder ----------------------------------------------------------
    w_ih0 = _reorder_ifgo_to_ifog(params["w_ih0"])
    w_hh0 = _reorder_ifgo_to_ifog(params["w_hh0"])
    b0 = _reorder_ifgo_to_ifog(params["b0"])
    w_ih1 = _reorder_ifgo_to_ifog(params["w_ih1"])
    w_hh1 = _reorder_ifgo_to_ifog(params["w_hh1"])
    b1 = _reorder_ifgo_to_ifog(params["b1"])

    # --- hoisted, time-invariant layer-0 input projection ----------------------
    # One lane-dense batched matmul; also folds the batch-first -> time-major
    # transpose so there is no separate HBM transpose of x.
    xproj0 = jnp.einsum("btc,cg->tbg", x, w_ih0) + b0          # (T, B, 4H)
    xproj0 = xproj0.astype(jnp.float32)

    vmem = pl.BlockSpec(memory_space=pltpu.MemorySpace.VMEM)
    cost = pl.CostEstimate(
        # two per-step recurrent matmuls (layer 0 + layer 1) + the hoisted
        # layer-1 input projection
        flops=3 * (2 * T * B * H * G),
        transcendentals=T * 2 * B * 5 * H,
        bytes_accessed=4 * (T * B * G + 3 * H * G + G + B * T * H),
    )

    h1_packed = pl.pallas_call(
        lstm_recurrence_kernel,
        out_shape=jax.ShapeDtypeStruct((B, T * H), jnp.float32),
        in_specs=[vmem, vmem, vmem, vmem, vmem],
        out_specs=vmem,
        cost_estimate=cost,
        compiler_params=pltpu.CompilerParams(
            vmem_limit_bytes=32 * 1024 * 1024),
    )(xproj0, w_hh0, w_ih1, w_hh1, b1)

    # --- deferred lane-dense output projection (already batch-first) ----------
    h1_seq = h1_packed.reshape(B, T, H)
    out = jnp.einsum("bth,ho->bto", h1_seq, params["w_out"]) + params["b_out"]
    return out.astype(jnp.float32)


# ---------------------------------------------------------------------------
# Deterministic init matching PyTorch param shapes (weights stored transposed
# for right-multiplication; ih/hh biases pre-summed; gate order [i,f,g,o]).
# ---------------------------------------------------------------------------
def init_params(key):
    k = 1.0 / jnp.sqrt(jnp.float32(N_HIDDEN))
    keys = jax.random.split(key, 9)
    u = lambda kk, shape: jax.random.uniform(kk, shape, jnp.float32, -k, k)
    return {
        # layer 0: torch weight_ih_l0 is (4H, in) -> stored (in, 4H)
        "w_ih0": u(keys[0], (N_INPUT, 4 * N_HIDDEN)),
        "w_hh0": u(keys[1], (N_HIDDEN, 4 * N_HIDDEN)),
        "b0":    u(keys[2], (1, 4 * N_HIDDEN)),           # = b_ih_l0 + b_hh_l0
        # layer 1: torch weight_ih_l1 is (4H, H) -> stored (H, 4H)
        "w_ih1": u(keys[3], (N_HIDDEN, 4 * N_HIDDEN)),
        "w_hh1": u(keys[4], (N_HIDDEN, 4 * N_HIDDEN)),
        "b1":    u(keys[5], (1, 4 * N_HIDDEN)),           # = b_ih_l1 + b_hh_l1
        # out: Linear(64, 21): torch weight (21, 64) -> stored (64, 21)
        "w_out": u(keys[6], (N_HIDDEN, N_OUTPUT)),
        "b_out": u(keys[7], (1, N_OUTPUT)),
    }


def rnn_reference(x, params):
    """Pure-JAX reference replicating nn.LSTM (gate order i,f,g,o) + nn.Linear."""
    B, T, _ = x.shape

    def cell(x_t, h, c, w_ih, w_hh, b):
        gates = x_t @ w_ih + h @ w_hh + b
        i, f, g, o = jnp.split(gates, 4, axis=-1)
        i, f, o = jax.nn.sigmoid(i), jax.nn.sigmoid(f), jax.nn.sigmoid(o)
        g = jnp.tanh(g)
        c = f * c + i * g
        h = o * jnp.tanh(c)
        return h, c

    h0 = c0 = h1 = c1 = jnp.zeros((B, N_HIDDEN), jnp.float32)
    outs = []
    for t in range(T):
        h0, c0 = cell(x[:, t], h0, c0, params["w_ih0"], params["w_hh0"], params["b0"])
        h1, c1 = cell(h0, h1, c1, params["w_ih1"], params["w_hh1"], params["b1"])
        outs.append(h1 @ params["w_out"] + params["b_out"])
    return jnp.stack(outs, axis=1)


if __name__ == "__main__":
    key = jax.random.PRNGKey(0)
    k_x, k_p = jax.random.split(key)

    B, T = 2, 8
    x = jax.random.normal(k_x, (B, T, N_INPUT), jnp.float32)
    params = init_params(k_p)

    out = jax.jit(rnn_forward)(x, params)
    out = jax.block_until_ready(out)

    assert out.shape == (B, T, N_OUTPUT), out.shape

    ref = rnn_reference(x, params)
    assert jnp.allclose(out, ref, atol=1e-5, rtol=1e-5), (
        float(jnp.max(jnp.abs(out - ref))))

    print("KERNEL_OK")
</pallas_src>

<mosaic_0001>
module attributes {stable_mosaic.version = 11 : i64} {
  func.func @lstm_recurrence_kernel(%arg0: memref<8x2x256xf32, #tpu.memory_space<vmem>>, %arg1: memref<64x256xf32, #tpu.memory_space<vmem>>, %arg2: memref<64x256xf32, #tpu.memory_space<vmem>>, %arg3: memref<64x256xf32, #tpu.memory_space<vmem>>, %arg4: memref<1x256xf32, #tpu.memory_space<vmem>>, %arg5: memref<2x512xf32, #tpu.memory_space<vmem>>) attributes {dimension_semantics = [], scalar_prefetch = 0 : i64, scratch_operands = 0 : i64, tpu.core_type = #tpu.core_type<tc>} {
    %c0 = arith.constant 0 : index
    %c0_0 = arith.constant 0 : index
    %0 = vector.load %arg1[%c0, %c0_0] : memref<64x256xf32, #tpu.memory_space<vmem>>, vector<64x256xf32>
    %c0_1 = arith.constant 0 : index
    %c0_2 = arith.constant 0 : index
    %1 = vector.load %arg2[%c0_1, %c0_2] : memref<64x256xf32, #tpu.memory_space<vmem>>, vector<64x256xf32>
    %c0_3 = arith.constant 0 : index
    %c0_4 = arith.constant 0 : index
    %2 = vector.load %arg3[%c0_3, %c0_4] : memref<64x256xf32, #tpu.memory_space<vmem>>, vector<64x256xf32>
    %cst = arith.constant 0.000000e+00 : f32
    %3 = vector.broadcast %cst : f32 to vector<2x64xf32>
    %cst_5 = arith.constant 0.000000e+00 : f32
    %4 = vector.broadcast %cst_5 : f32 to vector<2x64xf32>
    %c0_6 = arith.constant 0 : index
    %c0_7 = arith.constant 0 : index
    %c0_8 = arith.constant 0 : index
    %5 = vector.load %arg0[%c0_6, %c0_7, %c0_8] : memref<8x2x256xf32, #tpu.memory_space<vmem>>, vector<1x2x256xf32>
    %6 = vector.shape_cast %5 : vector<1x2x256xf32> to vector<2x256xf32>
    %cst_9 = arith.constant dense<0.000000e+00> : vector<2x256xf32>
    %7 = tpu.matmul %3, %0, %cst_9 {dimension_numbers = #tpu.dot_dimension_numbers<[1], [0], [0], [1], [0, 0, 1, 1], [], []>} : vector<2x64xf32>, vector<64x256xf32>, vector<2x256xf32> -> vector<2x256xf32>
    %8 = arith.addf %6, %7 : vector<2x256xf32>
    %9 = vector.extract_strided_slice %8 {offsets = [0, 0], sizes = [2, 192], strides = [1, 1]} : vector<2x256xf32> to vector<2x192xf32>
    %10 = arith.negf %9 : vector<2x192xf32>
    %11 = math.exp %10 : vector<2x192xf32>
    %cst_10 = arith.constant 1.000000e+00 : f32
    %12 = vector.broadcast %cst_10 : f32 to vector<2x192xf32>
    %13 = arith.addf %12, %11 : vector<2x192xf32>
    %14 = arith.divf %12, %13 : vector<2x192xf32>
    %15 = vector.extract_strided_slice %8 {offsets = [0, 192], sizes = [2, 64], strides = [1, 1]} : vector<2x256xf32> to vector<2x64xf32>
    %16 = math.tanh %15 : vector<2x64xf32>
    %17 = vector.extract_strided_slice %14 {offsets = [0, 0], sizes = [2, 64], strides = [1, 1]} : vector<2x192xf32> to vector<2x64xf32>
    %18 = vector.extract_strided_slice %14 {offsets = [0, 64], sizes = [2, 64], strides = [1, 1]} : vector<2x192xf32> to vector<2x64xf32>
    %19 = vector.extract_strided_slice %14 {offsets = [0, 128], sizes = [2, 64], strides = [1, 1]} : vector<2x192xf32> to vector<2x64xf32>
    %20 = arith.mulf %18, %4 : vector<2x64xf32>
    %21 = arith.mulf %17, %16 : vector<2x64xf32>
    %22 = arith.addf %20, %21 : vector<2x64xf32>
    %23 = math.tanh %22 : vector<2x64xf32>
    %24 = arith.mulf %19, %23 : vector<2x64xf32>
    %c1 = arith.constant 1 : index
    %c0_11 = arith.constant 0 : index
    %c0_12 = arith.constant 0 : index
    %25 = vector.load %arg0[%c1, %c0_11, %c0_12] : memref<8x2x256xf32, #tpu.memory_space<vmem>>, vector<1x2x256xf32>
    %26 = vector.shape_cast %25 : vector<1x2x256xf32> to vector<2x256xf32>
    %cst_13 = arith.constant dense<0.000000e+00> : vector<2x256xf32>
    %27 = tpu.matmul %24, %0, %cst_13 {dimension_numbers = #tpu.dot_dimension_numbers<[1], [0], [0], [1], [0, 0, 1, 1], [], []>} : vector<2x64xf32>, vector<64x256xf32>, vector<2x256xf32> -> vector<2x256xf32>
    %28 = arith.addf %26, %27 : vector<2x256xf32>
    %29 = vector.extract_strided_slice %28 {offsets = [0, 0], sizes = [2, 192], strides = [1, 1]} : vector<2x256xf32> to vector<2x192xf32>
    %30 = arith.negf %29 : vector<2x192xf32>
    %31 = math.exp %30 : vector<2x192xf32>
    %cst_14 = arith.constant 1.000000e+00 : f32
    %32 = vector.broadcast %cst_14 : f32 to vector<2x192xf32>
    %33 = arith.addf %32, %31 : vector<2x192xf32>
    %34 = arith.divf %32, %33 : vector<2x192xf32>
    %35 = vector.extract_strided_slice %28 {offsets = [0, 192], sizes = [2, 64], strides = [1, 1]} : vector<2x256xf32> to vector<2x64xf32>
    %36 = math.tanh %35 : vector<2x64xf32>
    %37 = vector.extract_strided_slice %34 {offsets = [0, 0], sizes = [2, 64], strides = [1, 1]} : vector<2x192xf32> to vector<2x64xf32>
    %38 = vector.extract_strided_slice %34 {offsets = [0, 64], sizes = [2, 64], strides = [1, 1]} : vector<2x192xf32> to vector<2x64xf32>
    %39 = vector.extract_strided_slice %34 {offsets = [0, 128], sizes = [2, 64], strides = [1, 1]} : vector<2x192xf32> to vector<2x64xf32>
    %40 = arith.mulf %38, %22 : vector<2x64xf32>
    %41 = arith.mulf %37, %36 : vector<2x64xf32>
    %42 = arith.addf %40, %41 : vector<2x64xf32>
    %43 = math.tanh %42 : vector<2x64xf32>
    %44 = arith.mulf %39, %43 : vector<2x64xf32>
    %c2 = arith.constant 2 : index
    %c0_15 = arith.constant 0 : index
    %c0_16 = arith.constant 0 : index
    %45 = vector.load %arg0[%c2, %c0_15, %c0_16] : memref<8x2x256xf32, #tpu.memory_space<vmem>>, vector<1x2x256xf32>
    %46 = vector.shape_cast %45 : vector<1x2x256xf32> to vector<2x256xf32>
    %cst_17 = arith.constant dense<0.000000e+00> : vector<2x256xf32>
    %47 = tpu.matmul %44, %0, %cst_17 {dimension_numbers = #tpu.dot_dimension_numbers<[1], [0], [0], [1], [0, 0, 1, 1], [], []>} : vector<2x64xf32>, vector<64x256xf32>, vector<2x256xf32> -> vector<2x256xf32>
    %48 = arith.addf %46, %47 : vector<2x256xf32>
    %49 = vector.extract_strided_slice %48 {offsets = [0, 0], sizes = [2, 192], strides = [1, 1]} : vector<2x256xf32> to vector<2x192xf32>
    %50 = arith.negf %49 : vector<2x192xf32>
    %51 = math.exp %50 : vector<2x192xf32>
    %cst_18 = arith.constant 1.000000e+00 : f32
    %52 = vector.broadcast %cst_18 : f32 to vector<2x192xf32>
    %53 = arith.addf %52, %51 : vector<2x192xf32>
    %54 = arith.divf %52, %53 : vector<2x192xf32>
    %55 = vector.extract_strided_slice %48 {offsets = [0, 192], sizes = [2, 64], strides = [1, 1]} : vector<2x256xf32> to vector<2x64xf32>
    %56 = math.tanh %55 : vector<2x64xf32>
    %57 = vector.extract_strided_slice %54 {offsets = [0, 0], sizes = [2, 64], strides = [1, 1]} : vector<2x192xf32> to vector<2x64xf32>
    %58 = vector.extract_strided_slice %54 {offsets = [0, 64], sizes = [2, 64], strides = [1, 1]} : vector<2x192xf32> to vector<2x64xf32>
    %59 = vector.extract_strided_slice %54 {offsets = [0, 128], sizes = [2, 64], strides = [1, 1]} : vector<2x192xf32> to vector<2x64xf32>
    %60 = arith.mulf %58, %42 : vector<2x64xf32>
    %61 = arith.mulf %57, %56 : vector<2x64xf32>
    %62 = arith.addf %60, %61 : vector<2x64xf32>
    %63 = math.tanh %62 : vector<2x64xf32>
    %64 = arith.mulf %59, %63 : vector<2x64xf32>
    %c3 = arith.constant 3 : index
    %c0_19 = arith.constant 0 : index
    %c0_20 = arith.constant 0 : index
    %65 = vector.load %arg0[%c3, %c0_19, %c0_20] : memref<8x2x256xf32, #tpu.memory_space<vmem>>, vector<1x2x256xf32>
    %66 = vector.shape_cast %65 : vector<1x2x256xf32> to vector<2x256xf32>
    %cst_21 = arith.constant dense<0.000000e+00> : vector<2x256xf32>
    %67 = tpu.matmul %64, %0, %cst_21 {dimension_numbers = #tpu.dot_dimension_numbers<[1], [0], [0], [1], [0, 0, 1, 1], [], []>} : vector<2x64xf32>, vector<64x256xf32>, vector<2x256xf32> -> vector<2x256xf32>
    %68 = arith.addf %66, %67 : vector<2x256xf32>
    %69 = vector.extract_strided_slice %68 {offsets = [0, 0], sizes = [2, 192], strides = [1, 1]} : vector<2x256xf32> to vector<2x192xf32>
    %70 = arith.negf %69 : vector<2x192xf32>
    %71 = math.exp %70 : vector<2x192xf32>
    %cst_22 = arith.constant 1.000000e+00 : f32
    %72 = vector.broadcast %cst_22 : f32 to vector<2x192xf32>
    %73 = arith.addf %72, %71 : vector<2x192xf32>
    %74 = arith.divf %72, %73 : vector<2x192xf32>
    %75 = vector.extract_strided_slice %68 {offsets = [0, 192], sizes = [2, 64], strides = [1, 1]} : vector<2x256xf32> to vector<2x64xf32>
    %76 = math.tanh %75 : vector<2x64xf32>
    %77 = vector.extract_strided_slice %74 {offsets = [0, 0], sizes = [2, 64], strides = [1, 1]} : vector<2x192xf32> to vector<2x64xf32>
    %78 = vector.extract_strided_slice %74 {offsets = [0, 64], sizes = [2, 64], strides = [1, 1]} : vector<2x192xf32> to vector<2x64xf32>
    %79 = vector.extract_strided_slice %74 {offsets = [0, 128], sizes = [2, 64], strides = [1, 1]} : vector<2x192xf32> to vector<2x64xf32>
    %80 = arith.mulf %78, %62 : vector<2x64xf32>
    %81 = arith.mulf %77, %76 : vector<2x64xf32>
    %82 = arith.addf %80, %81 : vector<2x64xf32>
    %83 = math.tanh %82 : vector<2x64xf32>
    %84 = arith.mulf %79, %83 : vector<2x64xf32>
    %c4 = arith.constant 4 : index
    %c0_23 = arith.constant 0 : index
    %c0_24 = arith.constant 0 : index
    %85 = vector.load %arg0[%c4, %c0_23, %c0_24] : memref<8x2x256xf32, #tpu.memory_space<vmem>>, vector<1x2x256xf32>
    %86 = vector.shape_cast %85 : vector<1x2x256xf32> to vector<2x256xf32>
    %cst_25 = arith.constant dense<0.000000e+00> : vector<2x256xf32>
    %87 = tpu.matmul %84, %0, %cst_25 {dimension_numbers = #tpu.dot_dimension_numbers<[1], [0], [0], [1], [0, 0, 1, 1], [], []>} : vector<2x64xf32>, vector<64x256xf32>, vector<2x256xf32> -> vector<2x256xf32>
    %88 = arith.addf %86, %87 : vector<2x256xf32>
    %89 = vector.extract_strided_slice %88 {offsets = [0, 0], sizes = [2, 192], strides = [1, 1]} : vector<2x256xf32> to vector<2x192xf32>
    %90 = arith.negf %89 : vector<2x192xf32>
    %91 = math.exp %90 : vector<2x192xf32>
    %cst_26 = arith.constant 1.000000e+00 : f32
    %92 = vector.broadcast %cst_26 : f32 to vector<2x192xf32>
    %93 = arith.addf %92, %91 : vector<2x192xf32>
    %94 = arith.divf %92, %93 : vector<2x192xf32>
    %95 = vector.extract_strided_slice %88 {offsets = [0, 192], sizes = [2, 64], strides = [1, 1]} : vector<2x256xf32> to vector<2x64xf32>
    %96 = math.tanh %95 : vector<2x64xf32>
    %97 = vector.extract_strided_slice %94 {offsets = [0, 0], sizes = [2, 64], strides = [1, 1]} : vector<2x192xf32> to vector<2x64xf32>
    %98 = vector.extract_strided_slice %94 {offsets = [0, 64], sizes = [2, 64], strides = [1, 1]} : vector<2x192xf32> to vector<2x64xf32>
    %99 = vector.extract_strided_slice %94 {offsets = [0, 128], sizes = [2, 64], strides = [1, 1]} : vector<2x192xf32> to vector<2x64xf32>
    %100 = arith.mulf %98, %82 : vector<2x64xf32>
    %101 = arith.mulf %97, %96 : vector<2x64xf32>
    %102 = arith.addf %100, %101 : vector<2x64xf32>
    %103 = math.tanh %102 : vector<2x64xf32>
    %104 = arith.mulf %99, %103 : vector<2x64xf32>
    %c5 = arith.constant 5 : index
    %c0_27 = arith.constant 0 : index
    %c0_28 = arith.constant 0 : index
    %105 = vector.load %arg0[%c5, %c0_27, %c0_28] : memref<8x2x256xf32, #tpu.memory_space<vmem>>, vector<1x2x256xf32>
    %106 = vector.shape_cast %105 : vector<1x2x256xf32> to vector<2x256xf32>
    %cst_29 = arith.constant dense<0.000000e+00> : vector<2x256xf32>
    %107 = tpu.matmul %104, %0, %cst_29 {dimension_numbers = #tpu.dot_dimension_numbers<[1], [0], [0], [1], [0, 0, 1, 1], [], []>} : vector<2x64xf32>, vector<64x256xf32>, vector<2x256xf32> -> vector<2x256xf32>
    %108 = arith.addf %106, %107 : vector<2x256xf32>
    %109 = vector.extract_strided_slice %108 {offsets = [0, 0], sizes = [2, 192], strides = [1, 1]} : vector<2x256xf32> to vector<2x192xf32>
    %110 = arith.negf %109 : vector<2x192xf32>
    %111 = math.exp %110 : vector<2x192xf32>
    %cst_30 = arith.constant 1.000000e+00 : f32
    %112 = vector.broadcast %cst_30 : f32 to vector<2x192xf32>
    %113 = arith.addf %112, %111 : vector<2x192xf32>
    %114 = arith.divf %112, %113 : vector<2x192xf32>
    %115 = vector.extract_strided_slice %108 {offsets = [0, 192], sizes = [2, 64], strides = [1, 1]} : vector<2x256xf32> to vector<2x64xf32>
    %116 = math.tanh %115 : vector<2x64xf32>
    %117 = vector.extract_strided_slice %114 {offsets = [0, 0], sizes = [2, 64], strides = [1, 1]} : vector<2x192xf32> to vector<2x64xf32>
    %118 = vector.extract_strided_slice %114 {offsets = [0, 64], sizes = [2, 64], strides = [1, 1]} : vector<2x192xf32> to vector<2x64xf32>
    %119 = vector.extract_strided_slice %114 {offsets = [0, 128], sizes = [2, 64], strides = [1, 1]} : vector<2x192xf32> to vector<2x64xf32>
    %120 = arith.mulf %118, %102 : vector<2x64xf32>
    %121 = arith.mulf %117, %116 : vector<2x64xf32>
    %122 = arith.addf %120, %121 : vector<2x64xf32>
    %123 = math.tanh %122 : vector<2x64xf32>
    %124 = arith.mulf %119, %123 : vector<2x64xf32>
    %c6 = arith.constant 6 : index
    %c0_31 = arith.constant 0 : index
    %c0_32 = arith.constant 0 : index
    %125 = vector.load %arg0[%c6, %c0_31, %c0_32] : memref<8x2x256xf32, #tpu.memory_space<vmem>>, vector<1x2x256xf32>
    %126 = vector.shape_cast %125 : vector<1x2x256xf32> to vector<2x256xf32>
    %cst_33 = arith.constant dense<0.000000e+00> : vector<2x256xf32>
    %127 = tpu.matmul %124, %0, %cst_33 {dimension_numbers = #tpu.dot_dimension_numbers<[1], [0], [0], [1], [0, 0, 1, 1], [], []>} : vector<2x64xf32>, vector<64x256xf32>, vector<2x256xf32> -> vector<2x256xf32>
    %128 = arith.addf %126, %127 : vector<2x256xf32>
    %129 = vector.extract_strided_slice %128 {offsets = [0, 0], sizes = [2, 192], strides = [1, 1]} : vector<2x256xf32> to vector<2x192xf32>
    %130 = arith.negf %129 : vector<2x192xf32>
    %131 = math.exp %130 : vector<2x192xf32>
    %cst_34 = arith.constant 1.000000e+00 : f32
    %132 = vector.broadcast %cst_34 : f32 to vector<2x192xf32>
    %133 = arith.addf %132, %131 : vector<2x192xf32>
    %134 = arith.divf %132, %133 : vector<2x192xf32>
    %135 = vector.extract_strided_slice %128 {offsets = [0, 192], sizes = [2, 64], strides = [1, 1]} : vector<2x256xf32> to vector<2x64xf32>
    %136 = math.tanh %135 : vector<2x64xf32>
    %137 = vector.extract_strided_slice %134 {offsets = [0, 0], sizes = [2, 64], strides = [1, 1]} : vector<2x192xf32> to vector<2x64xf32>
    %138 = vector.extract_strided_slice %134 {offsets = [0, 64], sizes = [2, 64], strides = [1, 1]} : vector<2x192xf32> to vector<2x64xf32>
    %139 = vector.extract_strided_slice %134 {offsets = [0, 128], sizes = [2, 64], strides = [1, 1]} : vector<2x192xf32> to vector<2x64xf32>
    %140 = arith.mulf %138, %122 : vector<2x64xf32>
    %141 = arith.mulf %137, %136 : vector<2x64xf32>
    %142 = arith.addf %140, %141 : vector<2x64xf32>
    %143 = math.tanh %142 : vector<2x64xf32>
    %144 = arith.mulf %139, %143 : vector<2x64xf32>
    %c7 = arith.constant 7 : index
    %c0_35 = arith.constant 0 : index
    %c0_36 = arith.constant 0 : index
    %145 = vector.load %arg0[%c7, %c0_35, %c0_36] : memref<8x2x256xf32, #tpu.memory_space<vmem>>, vector<1x2x256xf32>
    %146 = vector.shape_cast %145 : vector<1x2x256xf32> to vector<2x256xf32>
    %cst_37 = arith.constant dense<0.000000e+00> : vector<2x256xf32>
    %147 = tpu.matmul %144, %0, %cst_37 {dimension_numbers = #tpu.dot_dimension_numbers<[1], [0], [0], [1], [0, 0, 1, 1], [], []>} : vector<2x64xf32>, vector<64x256xf32>, vector<2x256xf32> -> vector<2x256xf32>
    %148 = arith.addf %146, %147 : vector<2x256xf32>
    %149 = vector.extract_strided_slice %148 {offsets = [0, 0], sizes = [2, 192], strides = [1, 1]} : vector<2x256xf32> to vector<2x192xf32>
    %150 = arith.negf %149 : vector<2x192xf32>
    %151 = math.exp %150 : vector<2x192xf32>
    %cst_38 = arith.constant 1.000000e+00 : f32
    %152 = vector.broadcast %cst_38 : f32 to vector<2x192xf32>
    %153 = arith.addf %152, %151 : vector<2x192xf32>
    %154 = arith.divf %152, %153 : vector<2x192xf32>
    %155 = vector.extract_strided_slice %148 {offsets = [0, 192], sizes = [2, 64], strides = [1, 1]} : vector<2x256xf32> to vector<2x64xf32>
    %156 = math.tanh %155 : vector<2x64xf32>
    %157 = vector.extract_strided_slice %154 {offsets = [0, 0], sizes = [2, 64], strides = [1, 1]} : vector<2x192xf32> to vector<2x64xf32>
    %158 = vector.extract_strided_slice %154 {offsets = [0, 64], sizes = [2, 64], strides = [1, 1]} : vector<2x192xf32> to vector<2x64xf32>
    %159 = vector.extract_strided_slice %154 {offsets = [0, 128], sizes = [2, 64], strides = [1, 1]} : vector<2x192xf32> to vector<2x64xf32>
    %160 = arith.mulf %158, %142 : vector<2x64xf32>
    %161 = arith.mulf %157, %156 : vector<2x64xf32>
    %162 = arith.addf %160, %161 : vector<2x64xf32>
    %163 = math.tanh %162 : vector<2x64xf32>
    %164 = arith.mulf %159, %163 : vector<2x64xf32>
    %165 = tpu.concatenate %24, %44, %64, %84, %104, %124, %144, %164 in 0 : vector<2x64xf32>, vector<2x64xf32>, vector<2x64xf32>, vector<2x64xf32>, vector<2x64xf32>, vector<2x64xf32>, vector<2x64xf32>, vector<2x64xf32> -> vector<16x64xf32>
    %c0_39 = arith.constant 0 : index
    %c0_40 = arith.constant 0 : index
    %166 = vector.load %arg4[%c0_39, %c0_40] : memref<1x256xf32, #tpu.memory_space<vmem>>, vector<1x256xf32>
    %167 = vector.shape_cast %166 : vector<1x256xf32> to vector<1x256xf32>
    %168 = vector.broadcast %167 : vector<1x256xf32> to vector<16x256xf32>
    %cst_41 = arith.constant dense<0.000000e+00> : vector<16x256xf32>
    %169 = tpu.matmul %165, %1, %cst_41 {dimension_numbers = #tpu.dot_dimension_numbers<[1], [0], [0], [1], [0, 0, 1, 1], [], []>} : vector<16x64xf32>, vector<64x256xf32>, vector<16x256xf32> -> vector<16x256xf32>
    %170 = arith.addf %169, %168 : vector<16x256xf32>
    %cst_42 = arith.constant 0.000000e+00 : f32
    %171 = vector.broadcast %cst_42 : f32 to vector<2x64xf32>
    %cst_43 = arith.constant 0.000000e+00 : f32
    %172 = vector.broadcast %cst_43 : f32 to vector<2x64xf32>
    %173 = vector.extract_strided_slice %170 {offsets = [0, 0], sizes = [2, 256], strides = [1, 1]} : vector<16x256xf32> to vector<2x256xf32>
    %cst_44 = arith.constant dense<0.000000e+00> : vector<2x256xf32>
    %174 = tpu.matmul %171, %2, %cst_44 {dimension_numbers = #tpu.dot_dimension_numbers<[1], [0], [0], [1], [0, 0, 1, 1], [], []>} : vector<2x64xf32>, vector<64x256xf32>, vector<2x256xf32> -> vector<2x256xf32>
    %175 = arith.addf %173, %174 : vector<2x256xf32>
    %176 = vector.extract_strided_slice %175 {offsets = [0, 0], sizes = [2, 192], strides = [1, 1]} : vector<2x256xf32> to vector<2x192xf32>
    %177 = arith.negf %176 : vector<2x192xf32>
    %178 = math.exp %177 : vector<2x192xf32>
    %cst_45 = arith.constant 1.000000e+00 : f32
    %179 = vector.broadcast %cst_45 : f32 to vector<2x192xf32>
    %180 = arith.addf %179, %178 : vector<2x192xf32>
    %181 = arith.divf %179, %180 : vector<2x192xf32>
    %182 = vector.extract_strided_slice %175 {offsets = [0, 192], sizes = [2, 64], strides = [1, 1]} : vector<2x256xf32> to vector<2x64xf32>
    %183 = math.tanh %182 : vector<2x64xf32>
    %184 = vector.extract_strided_slice %181 {offsets = [0, 0], sizes = [2, 64], strides = [1, 1]} : vector<2x192xf32> to vector<2x64xf32>
    %185 = vector.extract_strided_slice %181 {offsets = [0, 64], sizes = [2, 64], strides = [1, 1]} : vector<2x192xf32> to vector<2x64xf32>
    %186 = vector.extract_strided_slice %181 {offsets = [0, 128], sizes = [2, 64], strides = [1, 1]} : vector<2x192xf32> to vector<2x64xf32>
    %187 = arith.mulf %185, %172 : vector<2x64xf32>
    %188 = arith.mulf %184, %183 : vector<2x64xf32>
    %189 = arith.addf %187, %188 : vector<2x64xf32>
    %190 = math.tanh %189 : vector<2x64xf32>
    %191 = arith.mulf %186, %190 : vector<2x64xf32>
    %192 = vector.extract_strided_slice %170 {offsets = [2, 0], sizes = [2, 256], strides = [1, 1]} : vector<16x256xf32> to vector<2x256xf32>
    %cst_46 = arith.constant dense<0.000000e+00> : vector<2x256xf32>
    %193 = tpu.matmul %191, %2, %cst_46 {dimension_numbers = #tpu.dot_dimension_numbers<[1], [0], [0], [1], [0, 0, 1, 1], [], []>} : vector<2x64xf32>, vector<64x256xf32>, vector<2x256xf32> -> vector<2x256xf32>
    %194 = arith.addf %192, %193 : vector<2x256xf32>
    %195 = vector.extract_strided_slice %194 {offsets = [0, 0], sizes = [2, 192], strides = [1, 1]} : vector<2x256xf32> to vector<2x192xf32>
    %196 = arith.negf %195 : vector<2x192xf32>
    %197 = math.exp %196 : vector<2x192xf32>
    %cst_47 = arith.constant 1.000000e+00 : f32
    %198 = vector.broadcast %cst_47 : f32 to vector<2x192xf32>
    %199 = arith.addf %198, %197 : vector<2x192xf32>
    %200 = arith.divf %198, %199 : vector<2x192xf32>
    %201 = vector.extract_strided_slice %194 {offsets = [0, 192], sizes = [2, 64], strides = [1, 1]} : vector<2x256xf32> to vector<2x64xf32>
    %202 = math.tanh %201 : vector<2x64xf32>
    %203 = vector.extract_strided_slice %200 {offsets = [0, 0], sizes = [2, 64], strides = [1, 1]} : vector<2x192xf32> to vector<2x64xf32>
    %204 = vector.extract_strided_slice %200 {offsets = [0, 64], sizes = [2, 64], strides = [1, 1]} : vector<2x192xf32> to vector<2x64xf32>
    %205 = vector.extract_strided_slice %200 {offsets = [0, 128], sizes = [2, 64], strides = [1, 1]} : vector<2x192xf32> to vector<2x64xf32>
    %206 = arith.mulf %204, %189 : vector<2x64xf32>
    %207 = arith.mulf %203, %202 : vector<2x64xf32>
    %208 = arith.addf %206, %207 : vector<2x64xf32>
    %209 = math.tanh %208 : vector<2x64xf32>
    %210 = arith.mulf %205, %209 : vector<2x64xf32>
    %211 = vector.extract_strided_slice %170 {offsets = [4, 0], sizes = [2, 256], strides = [1, 1]} : vector<16x256xf32> to vector<2x256xf32>
    %cst_48 = arith.constant dense<0.000000e+00> : vector<2x256xf32>
    %212 = tpu.matmul %210, %2, %cst_48 {dimension_numbers = #tpu.dot_dimension_numbers<[1], [0], [0], [1], [0, 0, 1, 1], [], []>} : vector<2x64xf32>, vector<64x256xf32>, vector<2x256xf32> -> vector<2x256xf32>
    %213 = arith.addf %211, %212 : vector<2x256xf32>
    %214 = vector.extract_strided_slice %213 {offsets = [0, 0], sizes = [2, 192], strides = [1, 1]} : vector<2x256xf32> to vector<2x192xf32>
    %215 = arith.negf %214 : vector<2x192xf32>
    %216 = math.exp %215 : vector<2x192xf32>
    %cst_49 = arith.constant 1.000000e+00 : f32
    %217 = vector.broadcast %cst_49 : f32 to vector<2x192xf32>
    %218 = arith.addf %217, %216 : vector<2x192xf32>
    %219 = arith.divf %217, %218 : vector<2x192xf32>
    %220 = vector.extract_strided_slice %213 {offsets = [0, 192], sizes = [2, 64], strides = [1, 1]} : vector<2x256xf32> to vector<2x64xf32>
    %221 = math.tanh %220 : vector<2x64xf32>
    %222 = vector.extract_strided_slice %219 {offsets = [0, 0], sizes = [2, 64], strides = [1, 1]} : vector<2x192xf32> to vector<2x64xf32>
    %223 = vector.extract_strided_slice %219 {offsets = [0, 64], sizes = [2, 64], strides = [1, 1]} : vector<2x192xf32> to vector<2x64xf32>
    %224 = vector.extract_strided_slice %219 {offsets = [0, 128], sizes = [2, 64], strides = [1, 1]} : vector<2x192xf32> to vector<2x64xf32>
    %225 = arith.mulf %223, %208 : vector<2x64xf32>
    %226 = arith.mulf %222, %221 : vector<2x64xf32>
    %227 = arith.addf %225, %226 : vector<2x64xf32>
    %228 = math.tanh %227 : vector<2x64xf32>
    %229 = arith.mulf %224, %228 : vector<2x64xf32>
    %230 = vector.extract_strided_slice %170 {offsets = [6, 0], sizes = [2, 256], strides = [1, 1]} : vector<16x256xf32> to vector<2x256xf32>
    %cst_50 = arith.constant dense<0.000000e+00> : vector<2x256xf32>
    %231 = tpu.matmul %229, %2, %cst_50 {dimension_numbers = #tpu.dot_dimension_numbers<[1], [0], [0], [1], [0, 0, 1, 1], [], []>} : vector<2x64xf32>, vector<64x256xf32>, vector<2x256xf32> -> vector<2x256xf32>
    %232 = arith.addf %230, %231 : vector<2x256xf32>
    %233 = vector.extract_strided_slice %232 {offsets = [0, 0], sizes = [2, 192], strides = [1, 1]} : vector<2x256xf32> to vector<2x192xf32>
    %234 = arith.negf %233 : vector<2x192xf32>
    %235 = math.exp %234 : vector<2x192xf32>
    %cst_51 = arith.constant 1.000000e+00 : f32
    %236 = vector.broadcast %cst_51 : f32 to vector<2x192xf32>
    %237 = arith.addf %236, %235 : vector<2x192xf32>
    %238 = arith.divf %236, %237 : vector<2x192xf32>
    %239 = vector.extract_strided_slice %232 {offsets = [0, 192], sizes = [2, 64], strides = [1, 1]} : vector<2x256xf32> to vector<2x64xf32>
    %240 = math.tanh %239 : vector<2x64xf32>
    %241 = vector.extract_strided_slice %238 {offsets = [0, 0], sizes = [2, 64], strides = [1, 1]} : vector<2x192xf32> to vector<2x64xf32>
    %242 = vector.extract_strided_slice %238 {offsets = [0, 64], sizes = [2, 64], strides = [1, 1]} : vector<2x192xf32> to vector<2x64xf32>
    %243 = vector.extract_strided_slice %238 {offsets = [0, 128], sizes = [2, 64], strides = [1, 1]} : vector<2x192xf32> to vector<2x64xf32>
    %244 = arith.mulf %242, %227 : vector<2x64xf32>
    %245 = arith.mulf %241, %240 : vector<2x64xf32>
    %246 = arith.addf %244, %245 : vector<2x64xf32>
    %247 = math.tanh %246 : vector<2x64xf32>
    %248 = arith.mulf %243, %247 : vector<2x64xf32>
    %249 = vector.extract_strided_slice %170 {offsets = [8, 0], sizes = [2, 256], strides = [1, 1]} : vector<16x256xf32> to vector<2x256xf32>
    %cst_52 = arith.constant dense<0.000000e+00> : vector<2x256xf32>
    %250 = tpu.matmul %248, %2, %cst_52 {dimension_numbers = #tpu.dot_dimension_numbers<[1], [0], [0], [1], [0, 0, 1, 1], [], []>} : vector<2x64xf32>, vector<64x256xf32>, vector<2x256xf32> -> vector<2x256xf32>
    %251 = arith.addf %249, %250 : vector<2x256xf32>
    %252 = vector.extract_strided_slice %251 {offsets = [0, 0], sizes = [2, 192], strides = [1, 1]} : vector<2x256xf32> to vector<2x192xf32>
    %253 = arith.negf %252 : vector<2x192xf32>
    %254 = math.exp %253 : vector<2x192xf32>
    %cst_53 = arith.constant 1.000000e+00 : f32
    %255 = vector.broadcast %cst_53 : f32 to vector<2x192xf32>
    %256 = arith.addf %255, %254 : vector<2x192xf32>
    %257 = arith.divf %255, %256 : vector<2x192xf32>
    %258 = vector.extract_strided_slice %251 {offsets = [0, 192], sizes = [2, 64], strides = [1, 1]} : vector<2x256xf32> to vector<2x64xf32>
    %259 = math.tanh %258 : vector<2x64xf32>
    %260 = vector.extract_strided_slice %257 {offsets = [0, 0], sizes = [2, 64], strides = [1, 1]} : vector<2x192xf32> to vector<2x64xf32>
    %261 = vector.extract_strided_slice %257 {offsets = [0, 64], sizes = [2, 64], strides = [1, 1]} : vector<2x192xf32> to vector<2x64xf32>
    %262 = vector.extract_strided_slice %257 {offsets = [0, 128], sizes = [2, 64], strides = [1, 1]} : vector<2x192xf32> to vector<2x64xf32>
    %263 = arith.mulf %261, %246 : vector<2x64xf32>
    %264 = arith.mulf %260, %259 : vector<2x64xf32>
    %265 = arith.addf %263, %264 : vector<2x64xf32>
    %266 = math.tanh %265 : vector<2x64xf32>
    %267 = arith.mulf %262, %266 : vector<2x64xf32>
    %268 = vector.extract_strided_slice %170 {offsets = [10, 0], sizes = [2, 256], strides = [1, 1]} : vector<16x256xf32> to vector<2x256xf32>
    %cst_54 = arith.constant dense<0.000000e+00> : vector<2x256xf32>
    %269 = tpu.matmul %267, %2, %cst_54 {dimension_numbers = #tpu.dot_dimension_numbers<[1], [0], [0], [1], [0, 0, 1, 1], [], []>} : vector<2x64xf32>, vector<64x256xf32>, vector<2x256xf32> -> vector<2x256xf32>
    %270 = arith.addf %268, %269 : vector<2x256xf32>
    %271 = vector.extract_strided_slice %270 {offsets = [0, 0], sizes = [2, 192], strides = [1, 1]} : vector<2x256xf32> to vector<2x192xf32>
    %272 = arith.negf %271 : vector<2x192xf32>
    %273 = math.exp %272 : vector<2x192xf32>
    %cst_55 = arith.constant 1.000000e+00 : f32
    %274 = vector.broadcast %cst_55 : f32 to vector<2x192xf32>
    %275 = arith.addf %274, %273 : vector<2x192xf32>
    %276 = arith.divf %274, %275 : vector<2x192xf32>
    %277 = vector.extract_strided_slice %270 {offsets = [0, 192], sizes = [2, 64], strides = [1, 1]} : vector<2x256xf32> to vector<2x64xf32>
    %278 = math.tanh %277 : vector<2x64xf32>
    %279 = vector.extract_strided_slice %276 {offsets = [0, 0], sizes = [2, 64], strides = [1, 1]} : vector<2x192xf32> to vector<2x64xf32>
    %280 = vector.extract_strided_slice %276 {offsets = [0, 64], sizes = [2, 64], strides = [1, 1]} : vector<2x192xf32> to vector<2x64xf32>
    %281 = vector.extract_strided_slice %276 {offsets = [0, 128], sizes = [2, 64], strides = [1, 1]} : vector<2x192xf32> to vector<2x64xf32>
    %282 = arith.mulf %280, %265 : vector<2x64xf32>
    %283 = arith.mulf %279, %278 : vector<2x64xf32>
    %284 = arith.addf %282, %283 : vector<2x64xf32>
    %285 = math.tanh %284 : vector<2x64xf32>
    %286 = arith.mulf %281, %285 : vector<2x64xf32>
    %287 = vector.extract_strided_slice %170 {offsets = [12, 0], sizes = [2, 256], strides = [1, 1]} : vector<16x256xf32> to vector<2x256xf32>
    %cst_56 = arith.constant dense<0.000000e+00> : vector<2x256xf32>
    %288 = tpu.matmul %286, %2, %cst_56 {dimension_numbers = #tpu.dot_dimension_numbers<[1], [0], [0], [1], [0, 0, 1, 1], [], []>} : vector<2x64xf32>, vector<64x256xf32>, vector<2x256xf32> -> vector<2x256xf32>
    %289 = arith.addf %287, %288 : vector<2x256xf32>
    %290 = vector.extract_strided_slice %289 {offsets = [0, 0], sizes = [2, 192], strides = [1, 1]} : vector<2x256xf32> to vector<2x192xf32>
    %291 = arith.negf %290 : vector<2x192xf32>
    %292 = math.exp %291 : vector<2x192xf32>
    %cst_57 = arith.constant 1.000000e+00 : f32
    %293 = vector.broadcast %cst_57 : f32 to vector<2x192xf32>
    %294 = arith.addf %293, %292 : vector<2x192xf32>
    %295 = arith.divf %293, %294 : vector<2x192xf32>
    %296 = vector.extract_strided_slice %289 {offsets = [0, 192], sizes = [2, 64], strides = [1, 1]} : vector<2x256xf32> to vector<2x64xf32>
    %297 = math.tanh %296 : vector<2x64xf32>
    %298 = vector.extract_strided_slice %295 {offsets = [0, 0], sizes = [2, 64], strides = [1, 1]} : vector<2x192xf32> to vector<2x64xf32>
    %299 = vector.extract_strided_slice %295 {offsets = [0, 64], sizes = [2, 64], strides = [1, 1]} : vector<2x192xf32> to vector<2x64xf32>
    %300 = vector.extract_strided_slice %295 {offsets = [0, 128], sizes = [2, 64], strides = [1, 1]} : vector<2x192xf32> to vector<2x64xf32>
    %301 = arith.mulf %299, %284 : vector<2x64xf32>
    %302 = arith.mulf %298, %297 : vector<2x64xf32>
    %303 = arith.addf %301, %302 : vector<2x64xf32>
    %304 = math.tanh %303 : vector<2x64xf32>
    %305 = arith.mulf %300, %304 : vector<2x64xf32>
    %306 = vector.extract_strided_slice %170 {offsets = [14, 0], sizes = [2, 256], strides = [1, 1]} : vector<16x256xf32> to vector<2x256xf32>
    %cst_58 = arith.constant dense<0.000000e+00> : vector<2x256xf32>
    %307 = tpu.matmul %305, %2, %cst_58 {dimension_numbers = #tpu.dot_dimension_numbers<[1], [0], [0], [1], [0, 0, 1, 1], [], []>} : vector<2x64xf32>, vector<64x256xf32>, vector<2x256xf32> -> vector<2x256xf32>
    %308 = arith.addf %306, %307 : vector<2x256xf32>
    %309 = vector.extract_strided_slice %308 {offsets = [0, 0], sizes = [2, 192], strides = [1, 1]} : vector<2x256xf32> to vector<2x192xf32>
    %310 = arith.negf %309 : vector<2x192xf32>
    %311 = math.exp %310 : vector<2x192xf32>
    %cst_59 = arith.constant 1.000000e+00 : f32
    %312 = vector.broadcast %cst_59 : f32 to vector<2x192xf32>
    %313 = arith.addf %312, %311 : vector<2x192xf32>
    %314 = arith.divf %312, %313 : vector<2x192xf32>
    %315 = vector.extract_strided_slice %308 {offsets = [0, 192], sizes = [2, 64], strides = [1, 1]} : vector<2x256xf32> to vector<2x64xf32>
    %316 = math.tanh %315 : vector<2x64xf32>
    %317 = vector.extract_strided_slice %314 {offsets = [0, 0], sizes = [2, 64], strides = [1, 1]} : vector<2x192xf32> to vector<2x64xf32>
    %318 = vector.extract_strided_slice %314 {offsets = [0, 64], sizes = [2, 64], strides = [1, 1]} : vector<2x192xf32> to vector<2x64xf32>
    %319 = vector.extract_strided_slice %314 {offsets = [0, 128], sizes = [2, 64], strides = [1, 1]} : vector<2x192xf32> to vector<2x64xf32>
    %320 = arith.mulf %318, %303 : vector<2x64xf32>
    %321 = arith.mulf %317, %316 : vector<2x64xf32>
    %322 = arith.addf %320, %321 : vector<2x64xf32>
    %323 = math.tanh %322 : vector<2x64xf32>
    %324 = arith.mulf %319, %323 : vector<2x64xf32>
    %325 = tpu.concatenate %191, %210, %229, %248, %267, %286, %305, %324 in 1 : vector<2x64xf32>, vector<2x64xf32>, vector<2x64xf32>, vector<2x64xf32>, vector<2x64xf32>, vector<2x64xf32>, vector<2x64xf32>, vector<2x64xf32> -> vector<2x512xf32>
    %c0_60 = arith.constant 0 : index
    %c0_61 = arith.constant 0 : index
    %326 = vector.load %arg5[%c0_60, %c0_61] : memref<2x512xf32, #tpu.memory_space<vmem>>, vector<2x512xf32>
    tpu.vector_store %arg5[%c0_60, %c0_61], %325 {strides = array<i32>} : memref<2x512xf32, #tpu.memory_space<vmem>>, vector<2x512xf32>,
    return
  }
}

</mosaic_0001>

<llo_original>
// kernel: rnn_forward.1
$region0: #{rnn_forward.1}
  #allocation0 [shape = 'u32[]', space=smem, size = 0x4, offset = 0x4, fixed_abs, tag = 'smem constant byte address 0x4 - core index']
  #allocation1 [shape = 'u32[144,128]{1,0:T(1,128)}', space=vmem, size = 0x12000, scoped, tag = 'internal scratch']
  %s0 = inlined_call_operand.vmem [shape: f32[8,2,256], index: 0, kind: input, shape index: {}]
  %s1 = inlined_call_operand.vmem [shape: f32[64,256], index: 1, kind: input, shape index: {}]
  %s2 = inlined_call_operand.vmem [shape: f32[64,256], index: 2, kind: input, shape index: {}]
  %s3 = inlined_call_operand.vmem [shape: f32[64,256], index: 3, kind: input, shape index: {}]
  %s4 = inlined_call_operand.vmem [shape: f32[1,256], index: 4, kind: input, shape index: {}]
  %s5 = inlined_call_operand.vmem [shape: f32[2,512], index: 5, kind: output, shape index: {}]
  %s6 = sld [smem:[#allocation0]]
  $region30: #{rnn_forward.1} parent=0
    _
  %s8 = ssub.s32 1, %s6
  %s9 = scalar_select 0, %s8, %s6
  // Predicated region
  $region2: #{rnn_forward.1} parent=0 // pred_check
    _
  $region3: #{rnn_forward.1} parent=0 // pred_check_branch
    %11 = sbr.rel (0) target = $region5
  $region4: #{rnn_forward.1} parent=0 // pred_region
    _
  $region5: #{rnn_forward.1} parent=0 // pred_fallthru
    _
  // Predicated region
  $region6: #{rnn_forward.1} parent=0 // pred_check
    _
  $region7: #{rnn_forward.1} parent=0 // pred_check_branch
    %13 = sbr.rel (0) target = $region9
  $region8: #{rnn_forward.1} parent=0 // pred_region
    _
  $region9: #{rnn_forward.1} parent=0 // pred_fallthru
    _
  // Predicated region
  $region10: #{rnn_forward.1} parent=0 // pred_check
    _
  $region11: #{rnn_forward.1} parent=0 // pred_check_branch
    %15 = sbr.rel (0) target = $region13
  $region12: #{rnn_forward.1} parent=0 // pred_region
    _
  $region13: #{rnn_forward.1} parent=0 // pred_fallthru
    _
  // Predicated region
  $region14: #{rnn_forward.1} parent=0 // pred_check
    _
  $region15: #{rnn_forward.1} parent=0 // pred_check_branch
    %17 = sbr.rel (0) target = $region17
  $region16: #{rnn_forward.1} parent=0 // pred_region
    _
  $region17: #{rnn_forward.1} parent=0 // pred_fallthru
    _
  // Predicated region
  $region18: #{rnn_forward.1} parent=0 // pred_check
    _
  $region19: #{rnn_forward.1} parent=0 // pred_check_branch
    %19 = sbr.rel (0) target = $region21
  $region20: #{rnn_forward.1} parent=0 // pred_region
    _
  $region21: #{rnn_forward.1} parent=0 // pred_fallthru
    _
  %v20 = vld [vmem:[%s1] sm:$0xff]
  %v21 = vld [vmem:[%s1 + $0x8] sm:$0xff]
  %v22 = vld [vmem:[%s1 + $0x10] sm:$0xff]
  %v23 = vld [vmem:[%s1 + $0x18] sm:$0xff]
  %v24 = vld [vmem:[%s1 + $0x20] sm:$0xff]
  %v25 = vld [vmem:[%s1 + $0x28] sm:$0xff]
  %v26 = vld [vmem:[%s1 + $0x30] sm:$0xff]
  %v27 = vld [vmem:[%s1 + $0x38] sm:$0xff]
  %v28 = vld [vmem:[%s1 + $0x40] sm:$0xff]
  %v29 = vld [vmem:[%s1 + $0x48] sm:$0xff]
  %v30 = vld [vmem:[%s1 + $0x50] sm:$0xff]
  %v31 = vld [vmem:[%s1 + $0x58] sm:$0xff]
  %v32 = vld [vmem:[%s1 + $0x60] sm:$0xff]
  %v33 = vld [vmem:[%s1 + $0x68] sm:$0xff]
  %v34 = vld [vmem:[%s1 + $0x70] sm:$0xff]
  %v35 = vld [vmem:[%s1 + $0x78] sm:$0xff]
  %v36 = vld [vmem:[%s2] sm:$0xff]
  %v37 = vld [vmem:[%s2 + $0x8] sm:$0xff]
  %v38 = vld [vmem:[%s2 + $0x10] sm:$0xff]
  %v39 = vld [vmem:[%s2 + $0x18] sm:$0xff]
  %v40 = vld [vmem:[%s2 + $0x20] sm:$0xff]
  %v41 = vld [vmem:[%s2 + $0x28] sm:$0xff]
  %v42 = vld [vmem:[%s2 + $0x30] sm:$0xff]
  %v43 = vld [vmem:[%s2 + $0x38] sm:$0xff]
  %v44 = vld [vmem:[%s2 + $0x40] sm:$0xff]
  %v45 = vld [vmem:[%s2 + $0x48] sm:$0xff]
  %v46 = vld [vmem:[%s2 + $0x50] sm:$0xff]
  %v47 = vld [vmem:[%s2 + $0x58] sm:$0xff]
  %v48 = vld [vmem:[%s2 + $0x60] sm:$0xff]
  %v49 = vld [vmem:[%s2 + $0x68] sm:$0xff]
  %v50 = vld [vmem:[%s2 + $0x70] sm:$0xff]
  %v51 = vld [vmem:[%s2 + $0x78] sm:$0xff]
  %v52 = vld [vmem:[%s3] sm:$0xff]
  %v53 = vld [vmem:[%s3 + $0x8] sm:$0xff]
  %v54 = vld [vmem:[%s3 + $0x10] sm:$0xff]
  %v55 = vld [vmem:[%s3 + $0x18] sm:$0xff]
  %v56 = vld [vmem:[%s3 + $0x20] sm:$0xff]
  %v57 = vld [vmem:[%s3 + $0x28] sm:$0xff]
  %v58 = vld [vmem:[%s3 + $0x30] sm:$0xff]
  %v59 = vld [vmem:[%s3 + $0x38] sm:$0xff]
  %v60 = vld [vmem:[%s3 + $0x40] sm:$0xff]
  %v61 = vld [vmem:[%s3 + $0x48] sm:$0xff]
  %v62 = vld [vmem:[%s3 + $0x50] sm:$0xff]
  %v63 = vld [vmem:[%s3 + $0x58] sm:$0xff]
  %v64 = vld [vmem:[%s3 + $0x60] sm:$0xff]
  %v65 = vld [vmem:[%s3 + $0x68] sm:$0xff]
  %v66 = vld [vmem:[%s3 + $0x70] sm:$0xff]
  %v67 = vld [vmem:[%s3 + $0x78] sm:$0xff]
  %v68 = vld [vmem:[%s0] sm:$0xf]
  %vm69 = vcmask 523264
  %v71 = vsel %vm69, 0.0, 0
  %73 = vmatprep.subr.mxu0 0.0
  %74 = vmatpush1.msra.mxu0 0.0
  %75 = vmatprep.subr.mxu0 0.0
  %76 = vmatpush1.msra.mxu0 0.0
  %77 = vmatprep.subr.mxu0 0.0
  %78 = vmatpush1.msra.mxu0 0.0
  %79 = vmatprep.subr.mxu0 0.0
  %80 = vmatpush1.msra.mxu0 0.0
  %81 = vmatprep.subr.mxu0 0.0
  %82 = vmatpush1.msra.mxu0 0.0
  %83 = vmatprep.subr.mxu0 0.0
  %84 = vmatpush1.msra.mxu0 0.0
  %85 = vmatprep.subr.mxu0 0.0
  %86 = vmatpush1.msra.mxu0 0.0
  %87 = vmatprep.subr.mxu0 0.0
  %88 = vmatpush1.msra.mxu0 0.0
  %89 = vmatprep.subr.mxu0 %v35
  %90 = vmatpush1.msra.mxu0 %v34
  %91 = vmatprep.subr.mxu0 %v33
  %92 = vmatpush1.msra.mxu0 %v32
  %93 = vmatprep.subr.mxu0 %v31
  %94 = vmatpush1.msra.mxu0 %v30
  %95 = vmatprep.subr.mxu0 %v29
  %96 = vmatpush1.msra.mxu0 %v28
  %97 = vmatprep.subr.mxu0 %v27
  %98 = vmatpush1.msra.mxu0 %v26
  %99 = vmatprep.subr.mxu0 %v25
  %100 = vmatpush1.msra.mxu0 %v24
  %101 = vmatprep.subr.mxu0 %v23
  %102 = vmatpush1.msra.mxu0 %v22
  %103 = vmatprep.subr.mxu0 %v21
  %104 = vmatpush1.msra.mxu0 %v20
  %105 = vmatprep.subr.mxu0 0.0
  %106 = vmatpush2.msra.mxu0 0.0
  %107 = vmatprep.subr.mxu0 0.0
  %108 = vmatpush2.msra.mxu0 0.0
  %109 = vmatprep.subr.mxu0 0.0
  %110 = vmatpush2.msra.mxu0 0.0
  %111 = vmatprep.subr.mxu0 0.0
  %112 = vmatpush2.msra.mxu0 0.0
  %113 = vmatprep.subr.mxu0 0.0
  %114 = vmatpush2.msra.mxu0 0.0
  %115 = vmatprep.subr.mxu0 0.0
  %116 = vmatpush2.msra.mxu0 0.0
  %117 = vmatprep.subr.mxu0 0.0
  %118 = vmatpush2.msra.mxu0 0.0
  %119 = vmatprep.subr.mxu0 0.0
  %120 = vmatpush2.msra.mxu0 0.0
  %121 = vmatprep.subr.mxu0 0.0
  %122 = vmatpush2.msra.mxu0 0.0
  %123 = vmatprep.subr.mxu0 0.0
  %124 = vmatpush2.msra.mxu0 0.0
  %125 = vmatprep.subr.mxu0 0.0
  %126 = vmatpush2.msra.mxu0 0.0
  %127 = vmatprep.subr.mxu0 0.0
  %128 = vmatpush2.msra.mxu0 0.0
  %129 = vmatprep.subr.mxu0 0.0
  %130 = vmatpush2.msra.mxu0 0.0
  %131 = vmatprep.subr.mxu0 0.0
  %132 = vmatpush2.msra.mxu0 0.0
  %133 = vmatprep.subr.mxu0 0.0
  %134 = vmatpush2.msra.mxu0 0.0
  %135 = vmatprep.subr.mxu0 0.0
  %136 = vmatpush2.msra.mxu0 0.0
  %137 = vmatprep.mubr.f32.mxu0 0.0
  %138 = vmatmul.mubr.f32.gmra.mxu0 %v71
  %v139 = vpop.f32.mrf.mxu0
  %v140 = vadd.f32 0.0, %v139
  %v141 = vpop.f32.mrf.mxu0
  %v142 = vadd.f32 0.0, %v141
  %143 = vdwg.mxu0
  %v146 = vcombine.low %v140, %v142
  %v148 = vunpack.c.l.s4 1983009808
  %v149 = vunpack.c.0.s8 %v148
  %v150 = vlaneseq
  %v151 = vshrl.u32 %v150, 7
  %v152 = vsub.s32 %v149, %v151
  %v153 = vrot.slane %v146, %v152
  %v155 = vadd.f32 %v68, %v153
  %v156 = vxor.u32 %v155, 2147483648
  %v157 = vmul.f32 %v156, 1.442695
  %v158 = vpow.pop %v157
  %v159 = vadd.f32 %v158, 1.0
  %v160 = vrcp.pop %v159
  %v161 = vmul.f32 1.0, %v160
  %163 = vrot.lane.b32.xlu0 %v155, 64
  %v164 = vpop.permute.xlu0 %163
  %v165 = vrot.slane %v164, 2
  %v167 = vtanh.pop %v165
  %v168 = vmul.f32 %v161, 0.0
  %v169 = vmul.f32 %v161, %v167
  %171 = vrot.lane.b32.xlu0 %v169, 64
  %v172 = vpop.permute.xlu0 %171
  %v174 = vadd.f32 %v168, %v172
  %v175 = vtanh.pop %v174
  %v177 = vrot.slane %v161, 2
  %180 = vrot.lane.b32.xlu0 %v175, 64
  %v181 = vpop.permute.xlu0 %180
  %v183 = vmul.f32 %v177, %v181
  %s184 = scalar_lea.vmem %s0, 4
  %v185 = vld [vmem:[%s184] sm:$0xf]
  %v187 = vsel %vm69, %v183, 0
  %189 = vmatprep.subr.mxu0 0.0
  %190 = vmatpush1.msra.mxu0 0.0
  %191 = vmatprep.subr.mxu0 0.0
  %192 = vmatpush1.msra.mxu0 0.0
  %193 = vmatprep.subr.mxu0 0.0
  %194 = vmatpush1.msra.mxu0 0.0
  %195 = vmatprep.subr.mxu0 0.0
  %196 = vmatpush1.msra.mxu0 0.0
  %197 = vmatprep.subr.mxu0 0.0
  %198 = vmatpush1.msra.mxu0 0.0
  %199 = vmatprep.subr.mxu0 0.0
  %200 = vmatpush1.msra.mxu0 0.0
  %201 = vmatprep.subr.mxu0 0.0
  %202 = vmatpush1.msra.mxu0 0.0
  %203 = vmatprep.subr.mxu0 0.0
  %204 = vmatpush1.msra.mxu0 0.0
  %205 = vmatprep.subr.mxu0 %v35
  %206 = vmatpush1.msra.mxu0 %v34
  %207 = vmatprep.subr.mxu0 %v33
  %208 = vmatpush1.msra.mxu0 %v32
  %209 = vmatprep.subr.mxu0 %v31
  %210 = vmatpush1.msra.mxu0 %v30
  %211 = vmatprep.subr.mxu0 %v29
  %212 = vmatpush1.msra.mxu0 %v28
  %213 = vmatprep.subr.mxu0 %v27
  %214 = vmatpush1.msra.mxu0 %v26
  %215 = vmatprep.subr.mxu0 %v25
  %216 = vmatpush1.msra.mxu0 %v24
  %217 = vmatprep.subr.mxu0 %v23
  %218 = vmatpush1.msra.mxu0 %v22
  %219 = vmatprep.subr.mxu0 %v21
  %220 = vmatpush1.msra.mxu0 %v20
  %221 = vmatprep.subr.mxu0 0.0
  %222 = vmatpush2.msra.mxu0 0.0
  %223 = vmatprep.subr.mxu0 0.0
  %224 = vmatpush2.msra.mxu0 0.0
  %225 = vmatprep.subr.mxu0 0.0
  %226 = vmatpush2.msra.mxu0 0.0
  %227 = vmatprep.subr.mxu0 0.0
  %228 = vmatpush2.msra.mxu0 0.0
  %229 = vmatprep.subr.mxu0 0.0
  %230 = vmatpush2.msra.mxu0 0.0
  %231 = vmatprep.subr.mxu0 0.0
  %232 = vmatpush2.msra.mxu0 0.0
  %233 = vmatprep.subr.mxu0 0.0
  %234 = vmatpush2.msra.mxu0 0.0
  %235 = vmatprep.subr.mxu0 0.0
  %236 = vmatpush2.msra.mxu0 0.0
  %237 = vmatprep.subr.mxu0 0.0
  %238 = vmatpush2.msra.mxu0 0.0
  %239 = vmatprep.subr.mxu0 0.0
  %240 = vmatpush2.msra.mxu0 0.0
  %241 = vmatprep.subr.mxu0 0.0
  %242 = vmatpush2.msra.mxu0 0.0
  %243 = vmatprep.subr.mxu0 0.0
  %244 = vmatpush2.msra.mxu0 0.0
  %245 = vmatprep.subr.mxu0 0.0
  %246 = vmatpush2.msra.mxu0 0.0
  %247 = vmatprep.subr.mxu0 0.0
  %248 = vmatpush2.msra.mxu0 0.0
  %249 = vmatprep.subr.mxu0 0.0
  %250 = vmatpush2.msra.mxu0 0.0
  %251 = vmatprep.subr.mxu0 0.0
  %252 = vmatpush2.msra.mxu0 0.0
  %253 = vmatprep.mubr.f32.mxu0 0.0
  %254 = vmatmul.mubr.f32.gmra.mxu0 %v187
  %v255 = vpop.f32.mrf.mxu0
  %v256 = vadd.f32 0.0, %v255
  %v257 = vpop.f32.mrf.mxu0
  %v258 = vadd.f32 0.0, %v257
  %259 = vdwg.mxu0
  %v262 = vcombine.low %v256, %v258
  %v264 = vunpack.c.l.s4 1983009808
  %v265 = vunpack.c.0.s8 %v264
  %v266 = vlaneseq
  %v267 = vshrl.u32 %v266, 7
  %v268 = vsub.s32 %v265, %v267
  %v269 = vrot.slane %v262, %v268
  %v271 = vadd.f32 %v185, %v269
  %v272 = vxor.u32 %v271, 2147483648
  %v273 = vmul.f32 %v272, 1.442695
  %v274 = vpow.pop %v273
  %v275 = vadd.f32 %v274, 1.0
  %v276 = vrcp.pop %v275
  %v277 = vmul.f32 1.0, %v276
  %279 = vrot.lane.b32.xlu0 %v271, 64
  %v280 = vpop.permute.xlu0 %279
  %v281 = vrot.slane %v280, 2
  %v283 = vtanh.pop %v281
  %v284 = vmul.f32 %v277, %v174
  %v285 = vmul.f32 %v277, %v283
  %287 = vrot.lane.b32.xlu0 %v285, 64
  %v288 = vpop.permute.xlu0 %287
  %v290 = vadd.f32 %v284, %v288
  %v291 = vtanh.pop %v290
  %v293 = vrot.slane %v277, 2
  %296 = vrot.lane.b32.xlu0 %v291, 64
  %v297 = vpop.permute.xlu0 %296
  %v299 = vmul.f32 %v293, %v297
  %s300 = scalar_lea.vmem %s0, 8
  %v301 = vld [vmem:[%s300] sm:$0xf]
  %v303 = vsel %vm69, %v299, 0
  %305 = vmatprep.subr.mxu0 0.0
  %306 = vmatpush1.msra.mxu0 0.0
  %307 = vmatprep.subr.mxu0 0.0
  %308 = vmatpush1.msra.mxu0 0.0
  %309 = vmatprep.subr.mxu0 0.0
  %310 = vmatpush1.msra.mxu0 0.0
  %311 = vmatprep.subr.mxu0 0.0
  %312 = vmatpush1.msra.mxu0 0.0
  %313 = vmatprep.subr.mxu0 0.0
  %314 = vmatpush1.msra.mxu0 0.0
  %315 = vmatprep.subr.mxu0 0.0
  %316 = vmatpush1.msra.mxu0 0.0
  %317 = vmatprep.subr.mxu0 0.0
  %318 = vmatpush1.msra.mxu0 0.0
  %319 = vmatprep.subr.mxu0 0.0
  %320 = vmatpush1.msra.mxu0 0.0
  %321 = vmatprep.subr.mxu0 %v35
  %322 = vmatpush1.msra.mxu0 %v34
  %323 = vmatprep.subr.mxu0 %v33
  %324 = vmatpush1.msra.mxu0 %v32
  %325 = vmatprep.subr.mxu0 %v31
  %326 = vmatpush1.msra.mxu0 %v30
  %327 = vmatprep.subr.mxu0 %v29
  %328 = vmatpush1.msra.mxu0 %v28
  %329 = vmatprep.subr.mxu0 %v27
  %330 = vmatpush1.msra.mxu0 %v26
  %331 = vmatprep.subr.mxu0 %v25
  %332 = vmatpush1.msra.mxu0 %v24
  %333 = vmatprep.subr.mxu0 %v23
  %334 = vmatpush1.msra.mxu0 %v22
  %335 = vmatprep.subr.mxu0 %v21
  %336 = vmatpush1.msra.mxu0 %v20
  %337 = vmatprep.subr.mxu0 0.0
  %338 = vmatpush2.msra.mxu0 0.0
  %339 = vmatprep.subr.mxu0 0.0
  %340 = vmatpush2.msra.mxu0 0.0
  %341 = vmatprep.subr.mxu0 0.0
  %342 = vmatpush2.msra.mxu0 0.0
  %343 = vmatprep.subr.mxu0 0.0
  %344 = vmatpush2.msra.mxu0 0.0
  %345 = vmatprep.subr.mxu0 0.0
  %346 = vmatpush2.msra.mxu0 0.0
  %347 = vmatprep.subr.mxu0 0.0
  %348 = vmatpush2.msra.mxu0 0.0
  %349 = vmatprep.subr.mxu0 0.0
  %350 = vmatpush2.msra.mxu0 0.0
  %351 = vmatprep.subr.mxu0 0.0
  %352 = vmatpush2.msra.mxu0 0.0
  %353 = vmatprep.subr.mxu0 0.0
  %354 = vmatpush2.msra.mxu0 0.0
  %355 = vmatprep.subr.mxu0 0.0
  %356 = vmatpush2.msra.mxu0 0.0
  %357 = vmatprep.subr.mxu0 0.0
  %358 = vmatpush2.msra.mxu0 0.0
  %359 = vmatprep.subr.mxu0 0.0
  %360 = vmatpush2.msra.mxu0 0.0
  %361 = vmatprep.subr.mxu0 0.0
  %362 = vmatpush2.msra.mxu0 0.0
  %363 = vmatprep.subr.mxu0 0.0
  %364 = vmatpush2.msra.mxu0 0.0
  %365 = vmatprep.subr.mxu0 0.0
  %366 = vmatpush2.msra.mxu0 0.0
  %367 = vmatprep.subr.mxu0 0.0
  %368 = vmatpush2.msra.mxu0 0.0
  %369 = vmatprep.mubr.f32.mxu0 0.0
  %370 = vmatmul.mubr.f32.gmra.mxu0 %v303
  %v371 = vpop.f32.mrf.mxu0
  %v372 = vadd.f32 0.0, %v371
  %v373 = vpop.f32.mrf.mxu0
  %v374 = vadd.f32 0.0, %v373
  %375 = vdwg.mxu0
  %v378 = vcombine.low %v372, %v374
  %v380 = vunpack.c.l.s4 1983009808
  %v381 = vunpack.c.0.s8 %v380
  %v382 = vlaneseq
  %v383 = vshrl.u32 %v382, 7
  %v384 = vsub.s32 %v381, %v383
  %v385 = vrot.slane %v378, %v384
  %v387 = vadd.f32 %v301, %v385
  %v388 = vxor.u32 %v387, 2147483648
  %v389 = vmul.f32 %v388, 1.442695
  %v390 = vpow.pop %v389
  %v391 = vadd.f32 %v390, 1.0
  %v392 = vrcp.pop %v391
  %v393 = vmul.f32 1.0, %v392
  %395 = vrot.lane.b32.xlu0 %v387, 64
  %v396 = vpop.permute.xlu0 %395
  %v397 = vrot.slane %v396, 2
  %v399 = vtanh.pop %v397
  %v400 = vmul.f32 %v393, %v290
  %v401 = vmul.f32 %v393, %v399
  %403 = vrot.lane.b32.xlu0 %v401, 64
  %v404 = vpop.permute.xlu0 %403
  %v406 = vadd.f32 %v400, %v404
  %v407 = vtanh.pop %v406
  %v409 = vrot.slane %v393, 2
  %412 = vrot.lane.b32.xlu0 %v407, 64
  %v413 = vpop.permute.xlu0 %412
  %v415 = vmul.f32 %v409, %v413
  %s416 = scalar_lea.vmem %s0, 12
  %v417 = vld [vmem:[%s416] sm:$0xf]
  %v419 = vsel %vm69, %v415, 0
  %421 = vmatprep.subr.mxu0 0.0
  %422 = vmatpush1.msra.mxu0 0.0
  %423 = vmatprep.subr.mxu0 0.0
  %424 = vmatpush1.msra.mxu0 0.0
  %425 = vmatprep.subr.mxu0 0.0
  %426 = vmatpush1.msra.mxu0 0.0
  %427 = vmatprep.subr.mxu0 0.0
  %428 = vmatpush1.msra.mxu0 0.0
  %429 = vmatprep.subr.mxu0 0.0
  %430 = vmatpush1.msra.mxu0 0.0
  %431 = vmatprep.subr.mxu0 0.0
  %432 = vmatpush1.msra.mxu0 0.0
  %433 = vmatprep.subr.mxu0 0.0
  %434 = vmatpush1.msra.mxu0 0.0
  %435 = vmatprep.subr.mxu0 0.0
  %436 = vmatpush1.msra.mxu0 0.0
  %437 = vmatprep.subr.mxu0 %v35
  %438 = vmatpush1.msra.mxu0 %v34
  %439 = vmatprep.subr.mxu0 %v33
  %440 = vmatpush1.msra.mxu0 %v32
  %441 = vmatprep.subr.mxu0 %v31
  %442 = vmatpush1.msra.mxu0 %v30
  %443 = vmatprep.subr.mxu0 %v29
  %444 = vmatpush1.msra.mxu0 %v28
  %445 = vmatprep.subr.mxu0 %v27
  %446 = vmatpush1.msra.mxu0 %v26
  %447 = vmatprep.subr.mxu0 %v25
  %448 = vmatpush1.msra.mxu0 %v24
  %449 = vmatprep.subr.mxu0 %v23
  %450 = vmatpush1.msra.mxu0 %v22
  %451 = vmatprep.subr.mxu0 %v21
  %452 = vmatpush1.msra.mxu0 %v20
  %453 = vmatprep.subr.mxu0 0.0
  %454 = vmatpush2.msra.mxu0 0.0
  %455 = vmatprep.subr.mxu0 0.0
  %456 = vmatpush2.msra.mxu0 0.0
  %457 = vmatprep.subr.mxu0 0.0
  %458 = vmatpush2.msra.mxu0 0.0
  %459 = vmatprep.subr.mxu0 0.0
  %460 = vmatpush2.msra.mxu0 0.0
  %461 = vmatprep.subr.mxu0 0.0
  %462 = vmatpush2.msra.mxu0 0.0
  %463 = vmatprep.subr.mxu0 0.0
  %464 = vmatpush2.msra.mxu0 0.0
  %465 = vmatprep.subr.mxu0 0.0
  %466 = vmatpush2.msra.mxu0 0.0
  %467 = vmatprep.subr.mxu0 0.0
  %468 = vmatpush2.msra.mxu0 0.0
  %469 = vmatprep.subr.mxu0 0.0
  %470 = vmatpush2.msra.mxu0 0.0
  %471 = vmatprep.subr.mxu0 0.0
  %472 = vmatpush2.msra.mxu0 0.0
  %473 = vmatprep.subr.mxu0 0.0
  %474 = vmatpush2.msra.mxu0 0.0
  %475 = vmatprep.subr.mxu0 0.0
  %476 = vmatpush2.msra.mxu0 0.0
  %477 = vmatprep.subr.mxu0 0.0
  %478 = vmatpush2.msra.mxu0 0.0
  %479 = vmatprep.subr.mxu0 0.0
  %480 = vmatpush2.msra.mxu0 0.0
  %481 = vmatprep.subr.mxu0 0.0
  %482 = vmatpush2.msra.mxu0 0.0
  %483 = vmatprep.subr.mxu0 0.0
  %484 = vmatpush2.msra.mxu0 0.0
  %485 = vmatprep.mubr.f32.mxu0 0.0
  %486 = vmatmul.mubr.f32.gmra.mxu0 %v419
  %v487 = vpop.f32.mrf.mxu0
  %v488 = vadd.f32 0.0, %v487
  %v489 = vpop.f32.mrf.mxu0
  %v490 = vadd.f32 0.0, %v489
  %491 = vdwg.mxu0
  %v494 = vcombine.low %v488, %v490
  %v496 = vunpack.c.l.s4 1983009808
  %v497 = vunpack.c.0.s8 %v496
  %v498 = vlaneseq
  %v499 = vshrl.u32 %v498, 7
  %v500 = vsub.s32 %v497, %v499
  %v501 = vrot.slane %v494, %v500
  %v503 = vadd.f32 %v417, %v501
  %v504 = vxor.u32 %v503, 2147483648
  %v505 = vmul.f32 %v504, 1.442695
  %v506 = vpow.pop %v505
  %v507 = vadd.f32 %v506, 1.0
  %v508 = vrcp.pop %v507
  %v509 = vmul.f32 1.0, %v508
  %511 = vrot.lane.b32.xlu0 %v503, 64
  %v512 = vpop.permute.xlu0 %511
  %v513 = vrot.slane %v512, 2
  %v515 = vtanh.pop %v513
  %v516 = vmul.f32 %v509, %v406
  %v517 = vmul.f32 %v509, %v515
  %519 = vrot.lane.b32.xlu0 %v517, 64
  %v520 = vpop.permute.xlu0 %519
  %v522 = vadd.f32 %v516, %v520
  %v523 = vtanh.pop %v522
  %v525 = vrot.slane %v509, 2
  %528 = vrot.lane.b32.xlu0 %v523, 64
  %v529 = vpop.permute.xlu0 %528
  %v531 = vmul.f32 %v525, %v529
  %s532 = scalar_lea.vmem %s0, 16
  %v533 = vld [vmem:[%s532] sm:$0xf]
  %v535 = vsel %vm69, %v531, 0
  %537 = vmatprep.subr.mxu0 0.0
  %538 = vmatpush1.msra.mxu0 0.0
  %539 = vmatprep.subr.mxu0 0.0
  %540 = vmatpush1.msra.mxu0 0.0
  %541 = vmatprep.subr.mxu0 0.0
  %542 = vmatpush1.msra.mxu0 0.0
  %543 = vmatprep.subr.mxu0 0.0
  %544 = vmatpush1.msra.mxu0 0.0
  %545 = vmatprep.subr.mxu0 0.0
  %546 = vmatpush1.msra.mxu0 0.0
  %547 = vmatprep.subr.mxu0 0.0
  %548 = vmatpush1.msra.mxu0 0.0
  %549 = vmatprep.subr.mxu0 0.0
  %550 = vmatpush1.msra.mxu0 0.0
  %551 = vmatprep.subr.mxu0 0.0
  %552 = vmatpush1.msra.mxu0 0.0
  %553 = vmatprep.subr.mxu0 %v35
  %554 = vmatpush1.msra.mxu0 %v34
  %555 = vmatprep.subr.mxu0 %v33
  %556 = vmatpush1.msra.mxu0 %v32
  %557 = vmatprep.subr.mxu0 %v31
  %558 = vmatpush1.msra.mxu0 %v30
  %559 = vmatprep.subr.mxu0 %v29
  %560 = vmatpush1.msra.mxu0 %v28
  %561 = vmatprep.subr.mxu0 %v27
  %562 = vmatpush1.msra.mxu0 %v26
  %563 = vmatprep.subr.mxu0 %v25
  %564 = vmatpush1.msra.mxu0 %v24
  %565 = vmatprep.subr.mxu0 %v23
  %566 = vmatpush1.msra.mxu0 %v22
  %567 = vmatprep.subr.mxu0 %v21
  %568 = vmatpush1.msra.mxu0 %v20
  %569 = vmatprep.subr.mxu0 0.0
  %570 = vmatpush2.msra.mxu0 0.0
  %571 = vmatprep.subr.mxu0 0.0
  %572 = vmatpush2.msra.mxu0 0.0
  %573 = vmatprep.subr.mxu0 0.0
  %574 = vmatpush2.msra.mxu0 0.0
  %575 = vmatprep.subr.mxu0 0.0
  %576 = vmatpush2.msra.mxu0 0.0
  %577 = vmatprep.subr.mxu0 0.0
  %578 = vmatpush2.msra.mxu0 0.0
  %579 = vmatprep.subr.mxu0 0.0
  %580 = vmatpush2.msra.mxu0 0.0
  %581 = vmatprep.subr.mxu0 0.0
  %582 = vmatpush2.msra.mxu0 0.0
  %583 = vmatprep.subr.mxu0 0.0
  %584 = vmatpush2.msra.mxu0 0.0
  %585 = vmatprep.subr.mxu0 0.0
  %586 = vmatpush2.msra.mxu0 0.0
  %587 = vmatprep.subr.mxu0 0.0
  %588 = vmatpush2.msra.mxu0 0.0
  %589 = vmatprep.subr.mxu0 0.0
  %590 = vmatpush2.msra.mxu0 0.0
  %591 = vmatprep.subr.mxu0 0.0
  %592 = vmatpush2.msra.mxu0 0.0
  %593 = vmatprep.subr.mxu0 0.0
  %594 = vmatpush2.msra.mxu0 0.0
  %595 = vmatprep.subr.mxu0 0.0
  %596 = vmatpush2.msra.mxu0 0.0
  %597 = vmatprep.subr.mxu0 0.0
  %598 = vmatpush2.msra.mxu0 0.0
  %599 = vmatprep.subr.mxu0 0.0
  %600 = vmatpush2.msra.mxu0 0.0
  %601 = vmatprep.mubr.f32.mxu0 0.0
  %602 = vmatmul.mubr.f32.gmra.mxu0 %v535
  %v603 = vpop.f32.mrf.mxu0
  %v604 = vadd.f32 0.0, %v603
  %v605 = vpop.f32.mrf.mxu0
  %v606 = vadd.f32 0.0, %v605
  %607 = vdwg.mxu0
  %v610 = vcombine.low %v604, %v606
  %v612 = vunpack.c.l.s4 1983009808
  %v613 = vunpack.c.0.s8 %v612
  %v614 = vlaneseq
  %v615 = vshrl.u32 %v614, 7
  %v616 = vsub.s32 %v613, %v615
  %v617 = vrot.slane %v610, %v616
  %v619 = vadd.f32 %v533, %v617
  %v620 = vxor.u32 %v619, 2147483648
  %v621 = vmul.f32 %v620, 1.442695
  %v622 = vpow.pop %v621
  %v623 = vadd.f32 %v622, 1.0
  %v624 = vrcp.pop %v623
  %v625 = vmul.f32 1.0, %v624
  %627 = vrot.lane.b32.xlu0 %v619, 64
  %v628 = vpop.permute.xlu0 %627
  %v629 = vrot.slane %v628, 2
  %v631 = vtanh.pop %v629
  %v632 = vmul.f32 %v625, %v522
  %v633 = vmul.f32 %v625, %v631
  %635 = vrot.lane.b32.xlu0 %v633, 64
  %v636 = vpop.permute.xlu0 %635
  %v638 = vadd.f32 %v632, %v636
  %v639 = vtanh.pop %v638
  %v641 = vrot.slane %v625, 2
  %644 = vrot.lane.b32.xlu0 %v639, 64
  %v645 = vpop.permute.xlu0 %644
  %v647 = vmul.f32 %v641, %v645
  %s648 = scalar_lea.vmem %s0, 20
  %v649 = vld [vmem:[%s648] sm:$0xf]
  %v651 = vsel %vm69, %v647, 0
  %653 = vmatprep.subr.mxu0 0.0
  %654 = vmatpush1.msra.mxu0 0.0
  %655 = vmatprep.subr.mxu0 0.0
  %656 = vmatpush1.msra.mxu0 0.0
  %657 = vmatprep.subr.mxu0 0.0
  %658 = vmatpush1.msra.mxu0 0.0
  %659 = vmatprep.subr.mxu0 0.0
  %660 = vmatpush1.msra.mxu0 0.0
  %661 = vmatprep.subr.mxu0 0.0
  %662 = vmatpush1.msra.mxu0 0.0
  %663 = vmatprep.subr.mxu0 0.0
  %664 = vmatpush1.msra.mxu0 0.0
  %665 = vmatprep.subr.mxu0 0.0
  %666 = vmatpush1.msra.mxu0 0.0
  %667 = vmatprep.subr.mxu0 0.0
  %668 = vmatpush1.msra.mxu0 0.0
  %669 = vmatprep.subr.mxu0 %v35
  %670 = vmatpush1.msra.mxu0 %v34
  %671 = vmatprep.subr.mxu0 %v33
  %672 = vmatpush1.msra.mxu0 %v32
  %673 = vmatprep.subr.mxu0 %v31
  %674 = vmatpush1.msra.mxu0 %v30
  %675 = vmatprep.subr.mxu0 %v29
  %676 = vmatpush1.msra.mxu0 %v28
  %677 = vmatprep.subr.mxu0 %v27
  %678 = vmatpush1.msra.mxu0 %v26
  %679 = vmatprep.subr.mxu0 %v25
  %680 = vmatpush1.msra.mxu0 %v24
  %681 = vmatprep.subr.mxu0 %v23
  %682 = vmatpush1.msra.mxu0 %v22
  %683 = vmatprep.subr.mxu0 %v21
  %684 = vmatpush1.msra.mxu0 %v20
  %685 = vmatprep.subr.mxu0 0.0
  %686 = vmatpush2.msra.mxu0 0.0
  %687 = vmatprep.subr.mxu0 0.0
  %688 = vmatpush2.msra.mxu0 0.0
  %689 = vmatprep.subr.mxu0 0.0
  %690 = vmatpush2.msra.mxu0 0.0
  %691 = vmatprep.subr.mxu0 0.0
  %692 = vmatpush2.msra.mxu0 0.0
  %693 = vmatprep.subr.mxu0 0.0
  %694 = vmatpush2.msra.mxu0 0.0
  %695 = vmatprep.subr.mxu0 0.0
  %696 = vmatpush2.msra.mxu0 0.0
  %697 = vmatprep.subr.mxu0 0.0
  %698 = vmatpush2.msra.mxu0 0.0
  %699 = vmatprep.subr.mxu0 0.0
  %700 = vmatpush2.msra.mxu0 0.0
  %701 = vmatprep.subr.mxu0 0.0
  %702 = vmatpush2.msra.mxu0 0.0
  %703 = vmatprep.subr.mxu0 0.0
  %704 = vmatpush2.msra.mxu0 0.0
  %705 = vmatprep.subr.mxu0 0.0
  %706 = vmatpush2.msra.mxu0 0.0
  %707 = vmatprep.subr.mxu0 0.0
  %708 = vmatpush2.msra.mxu0 0.0
  %709 = vmatprep.subr.mxu0 0.0
  %710 = vmatpush2.msra.mxu0 0.0
  %711 = vmatprep.subr.mxu0 0.0
  %712 = vmatpush2.msra.mxu0 0.0
  %713 = vmatprep.subr.mxu0 0.0
  %714 = vmatpush2.msra.mxu0 0.0
  %715 = vmatprep.subr.mxu0 0.0
  %716 = vmatpush2.msra.mxu0 0.0
  %717 = vmatprep.mubr.f32.mxu0 0.0
  %718 = vmatmul.mubr.f32.gmra.mxu0 %v651
  %v719 = vpop.f32.mrf.mxu0
  %v720 = vadd.f32 0.0, %v719
  %v721 = vpop.f32.mrf.mxu0
  %v722 = vadd.f32 0.0, %v721
  %723 = vdwg.mxu0
  %v726 = vcombine.low %v720, %v722
  %v728 = vunpack.c.l.s4 1983009808
  %v729 = vunpack.c.0.s8 %v728
  %v730 = vlaneseq
  %v731 = vshrl.u32 %v730, 7
  %v732 = vsub.s32 %v729, %v731
  %v733 = vrot.slane %v726, %v732
  %v735 = vadd.f32 %v649, %v733
  %v736 = vxor.u32 %v735, 2147483648
  %v737 = vmul.f32 %v736, 1.442695
  %v738 = vpow.pop %v737
  %v739 = vadd.f32 %v738, 1.0
  %v740 = vrcp.pop %v739
  %v741 = vmul.f32 1.0, %v740
  %743 = vrot.lane.b32.xlu0 %v735, 64
  %v744 = vpop.permute.xlu0 %743
  %v745 = vrot.slane %v744, 2
  %v747 = vtanh.pop %v745
  %v748 = vmul.f32 %v741, %v638
  %v749 = vmul.f32 %v741, %v747
  %751 = vrot.lane.b32.xlu0 %v749, 64
  %v752 = vpop.permute.xlu0 %751
  %v754 = vadd.f32 %v748, %v752
  %v755 = vtanh.pop %v754
  %v757 = vrot.slane %v741, 2
  %760 = vrot.lane.b32.xlu0 %v755, 64
  %v761 = vpop.permute.xlu0 %760
  %v763 = vmul.f32 %v757, %v761
  %s764 = scalar_lea.vmem %s0, 24
  %v765 = vld [vmem:[%s764] sm:$0xf]
  %v767 = vsel %vm69, %v763, 0
  %769 = vmatprep.subr.mxu0 0.0
  %770 = vmatpush1.msra.mxu0 0.0
  %771 = vmatprep.subr.mxu0 0.0
  %772 = vmatpush1.msra.mxu0 0.0
  %773 = vmatprep.subr.mxu0 0.0
  %774 = vmatpush1.msra.mxu0 0.0
  %775 = vmatprep.subr.mxu0 0.0
  %776 = vmatpush1.msra.mxu0 0.0
  %777 = vmatprep.subr.mxu0 0.0
  %778 = vmatpush1.msra.mxu0 0.0
  %779 = vmatprep.subr.mxu0 0.0
  %780 = vmatpush1.msra.mxu0 0.0
  %781 = vmatprep.subr.mxu0 0.0
  %782 = vmatpush1.msra.mxu0 0.0
  %783 = vmatprep.subr.mxu0 0.0
  %784 = vmatpush1.msra.mxu0 0.0
  %785 = vmatprep.subr.mxu0 %v35
  %786 = vmatpush1.msra.mxu0 %v34
  %787 = vmatprep.subr.mxu0 %v33
  %788 = vmatpush1.msra.mxu0 %v32
  %789 = vmatprep.subr.mxu0 %v31
  %790 = vmatpush1.msra.mxu0 %v30
  %791 = vmatprep.subr.mxu0 %v29
  %792 = vmatpush1.msra.mxu0 %v28
  %793 = vmatprep.subr.mxu0 %v27
  %794 = vmatpush1.msra.mxu0 %v26
  %795 = vmatprep.subr.mxu0 %v25
  %796 = vmatpush1.msra.mxu0 %v24
  %797 = vmatprep.subr.mxu0 %v23
  %798 = vmatpush1.msra.mxu0 %v22
  %799 = vmatprep.subr.mxu0 %v21
  %800 = vmatpush1.msra.mxu0 %v20
  %801 = vmatprep.subr.mxu0 0.0
  %802 = vmatpush2.msra.mxu0 0.0
  %803 = vmatprep.subr.mxu0 0.0
  %804 = vmatpush2.msra.mxu0 0.0
  %805 = vmatprep.subr.mxu0 0.0
  %806 = vmatpush2.msra.mxu0 0.0
  %807 = vmatprep.subr.mxu0 0.0
  %808 = vmatpush2.msra.mxu0 0.0
  %809 = vmatprep.subr.mxu0 0.0
  %810 = vmatpush2.msra.mxu0 0.0
  %811 = vmatprep.subr.mxu0 0.0
  %812 = vmatpush2.msra.mxu0 0.0
  %813 = vmatprep.subr.mxu0 0.0
  %814 = vmatpush2.msra.mxu0 0.0
  %815 = vmatprep.subr.mxu0 0.0
  %816 = vmatpush2.msra.mxu0 0.0
  %817 = vmatprep.subr.mxu0 0.0
  %818 = vmatpush2.msra.mxu0 0.0
  %819 = vmatprep.subr.mxu0 0.0
  %820 = vmatpush2.msra.mxu0 0.0
  %821 = vmatprep.subr.mxu0 0.0
  %822 = vmatpush2.msra.mxu0 0.0
  %823 = vmatprep.subr.mxu0 0.0
  %824 = vmatpush2.msra.mxu0 0.0
  %825 = vmatprep.subr.mxu0 0.0
  %826 = vmatpush2.msra.mxu0 0.0
  %827 = vmatprep.subr.mxu0 0.0
  %828 = vmatpush2.msra.mxu0 0.0
  %829 = vmatprep.subr.mxu0 0.0
  %830 = vmatpush2.msra.mxu0 0.0
  %831 = vmatprep.subr.mxu0 0.0
  %832 = vmatpush2.msra.mxu0 0.0
  %833 = vmatprep.mubr.f32.mxu0 0.0
  %834 = vmatmul.mubr.f32.gmra.mxu0 %v767
  %v835 = vpop.f32.mrf.mxu0
  %v836 = vadd.f32 0.0, %v835
  %v837 = vpop.f32.mrf.mxu0
  %v838 = vadd.f32 0.0, %v837
  %839 = vdwg.mxu0
  %v842 = vcombine.low %v836, %v838
  %v844 = vunpack.c.l.s4 1983009808
  %v845 = vunpack.c.0.s8 %v844
  %v846 = vlaneseq
  %v847 = vshrl.u32 %v846, 7
  %v848 = vsub.s32 %v845, %v847
  %v849 = vrot.slane %v842, %v848
  %v851 = vadd.f32 %v765, %v849
  %v852 = vxor.u32 %v851, 2147483648
  %v853 = vmul.f32 %v852, 1.442695
  %v854 = vpow.pop %v853
  %v855 = vadd.f32 %v854, 1.0
  %v856 = vrcp.pop %v855
  %v857 = vmul.f32 1.0, %v856
  %859 = vrot.lane.b32.xlu0 %v851, 64
  %v860 = vpop.permute.xlu0 %859
  %v861 = vrot.slane %v860, 2
  %v863 = vtanh.pop %v861
  %v864 = vmul.f32 %v857, %v754
  %v865 = vmul.f32 %v857, %v863
  %867 = vrot.lane.b32.xlu0 %v865, 64
  %v868 = vpop.permute.xlu0 %867
  %v870 = vadd.f32 %v864, %v868
  %v871 = vtanh.pop %v870
  %v873 = vrot.slane %v857, 2
  %876 = vrot.lane.b32.xlu0 %v871, 64
  %v877 = vpop.permute.xlu0 %876
  %v879 = vmul.f32 %v873, %v877
  %s880 = scalar_lea.vmem %s0, 28
  %v881 = vld [vmem:[%s880] sm:$0xf]
  %v883 = vsel %vm69, %v879, 0
  %885 = vmatprep.subr.mxu0 0.0
  %886 = vmatpush1.msra.mxu0 0.0
  %887 = vmatprep.subr.mxu0 0.0
  %888 = vmatpush1.msra.mxu0 0.0
  %889 = vmatprep.subr.mxu0 0.0
  %890 = vmatpush1.msra.mxu0 0.0
  %891 = vmatprep.subr.mxu0 0.0
  %892 = vmatpush1.msra.mxu0 0.0
  %893 = vmatprep.subr.mxu0 0.0
  %894 = vmatpush1.msra.mxu0 0.0
  %895 = vmatprep.subr.mxu0 0.0
  %896 = vmatpush1.msra.mxu0 0.0
  %897 = vmatprep.subr.mxu0 0.0
  %898 = vmatpush1.msra.mxu0 0.0
  %899 = vmatprep.subr.mxu0 0.0
  %900 = vmatpush1.msra.mxu0 0.0
  %901 = vmatprep.subr.mxu0 %v35
  %902 = vmatpush1.msra.mxu0 %v34
  %903 = vmatprep.subr.mxu0 %v33
  %904 = vmatpush1.msra.mxu0 %v32
  %905 = vmatprep.subr.mxu0 %v31
  %906 = vmatpush1.msra.mxu0 %v30
  %907 = vmatprep.subr.mxu0 %v29
  %908 = vmatpush1.msra.mxu0 %v28
  %909 = vmatprep.subr.mxu0 %v27
  %910 = vmatpush1.msra.mxu0 %v26
  %911 = vmatprep.subr.mxu0 %v25
  %912 = vmatpush1.msra.mxu0 %v24
  %913 = vmatprep.subr.mxu0 %v23
  %914 = vmatpush1.msra.mxu0 %v22
  %915 = vmatprep.subr.mxu0 %v21
  %916 = vmatpush1.msra.mxu0 %v20
  %917 = vmatprep.subr.mxu0 0.0
  %918 = vmatpush2.msra.mxu0 0.0
  %919 = vmatprep.subr.mxu0 0.0
  %920 = vmatpush2.msra.mxu0 0.0
  %921 = vmatprep.subr.mxu0 0.0
  %922 = vmatpush2.msra.mxu0 0.0
  %923 = vmatprep.subr.mxu0 0.0
  %924 = vmatpush2.msra.mxu0 0.0
  %925 = vmatprep.subr.mxu0 0.0
  %926 = vmatpush2.msra.mxu0 0.0
  %927 = vmatprep.subr.mxu0 0.0
  %928 = vmatpush2.msra.mxu0 0.0
  %929 = vmatprep.subr.mxu0 0.0
  %930 = vmatpush2.msra.mxu0 0.0
  %931 = vmatprep.subr.mxu0 0.0
  %932 = vmatpush2.msra.mxu0 0.0
  %933 = vmatprep.subr.mxu0 0.0
  %934 = vmatpush2.msra.mxu0 0.0
  %935 = vmatprep.subr.mxu0 0.0
  %936 = vmatpush2.msra.mxu0 0.0
  %937 = vmatprep.subr.mxu0 0.0
  %938 = vmatpush2.msra.mxu0 0.0
  %939 = vmatprep.subr.mxu0 0.0
  %940 = vmatpush2.msra.mxu0 0.0
  %941 = vmatprep.subr.mxu0 0.0
  %942 = vmatpush2.msra.mxu0 0.0
  %943 = vmatprep.subr.mxu0 0.0
  %944 = vmatpush2.msra.mxu0 0.0
  %945 = vmatprep.subr.mxu0 0.0
  %946 = vmatpush2.msra.mxu0 0.0
  %947 = vmatprep.subr.mxu0 0.0
  %948 = vmatpush2.msra.mxu0 0.0
  %949 = vmatprep.mubr.f32.mxu0 0.0
  %950 = vmatmul.mubr.f32.gmra.mxu0 %v883
  %v951 = vpop.f32.mrf.mxu0
  %v952 = vadd.f32 0.0, %v951
  %v953 = vpop.f32.mrf.mxu0
  %v954 = vadd.f32 0.0, %v953
  %955 = vdwg.mxu0
  %v958 = vcombine.low %v952, %v954
  %v960 = vunpack.c.l.s4 1983009808
  %v961 = vunpack.c.0.s8 %v960
  %v962 = vlaneseq
  %v963 = vshrl.u32 %v962, 7
  %v964 = vsub.s32 %v961, %v963
  %v965 = vrot.slane %v958, %v964
  %v967 = vadd.f32 %v881, %v965
  %v968 = vxor.u32 %v967, 2147483648
  %v969 = vmul.f32 %v968, 1.442695
  %v970 = vpow.pop %v969
  %v971 = vadd.f32 %v970, 1.0
  %v972 = vrcp.pop %v971
  %v973 = vmul.f32 1.0, %v972
  %975 = vrot.lane.b32.xlu0 %v967, 64
  %v976 = vpop.permute.xlu0 %975
  %v977 = vrot.slane %v976, 2
  %v979 = vtanh.pop %v977
  %v980 = vmul.f32 %v973, %v870
  %v981 = vmul.f32 %v973, %v979
  %983 = vrot.lane.b32.xlu0 %v981, 64
  %v984 = vpop.permute.xlu0 %983
  %v986 = vadd.f32 %v980, %v984
  %v987 = vtanh.pop %v986
  %v989 = vrot.slane %v973, 2
  %992 = vrot.lane.b32.xlu0 %v987, 64
  %v993 = vpop.permute.xlu0 %992
  %v995 = vmul.f32 %v989, %v993
  %v996 = vcombine.low %v299, %v299
  %v998 = vunpack.c.l.s4 1983009808
  %v999 = vunpack.c.0.s8 %v998
  %v1000 = vlaneseq
  %v1001 = vshrl.u32 %v1000, 7
  %v1002 = vsub.s32 %v999, %v1001
  %v1003 = vrot.slane %v996, %v1002
  %v1006 = vunpack.c.l.s4 1983009808
  %v1007 = vunpack.c.0.s8 %v1006
  %v1008 = vlaneseq
  %v1009 = vshrl.u32 %v1008, 7
  %v1010 = vsub.s32 %v1007, %v1009
  %v1011 = vrot.slane %v415, %v1010
  %v1012 = vcombine.low %v1011, %v1011
  %v1014 = vcombine.low %v531, %v531
  %v1016 = vunpack.c.l.s4 1983009808
  %v1017 = vunpack.c.0.s8 %v1016
  %v1018 = vlaneseq
  %v1019 = vshrl.u32 %v1018, 7
  %v1020 = vsub.s32 %v1017, %v1019
  %v1021 = vrot.slane %v1014, %v1020
  %v1022 = vcombine.low %v1021, %v1021
  %v1024 = vcombine.low %v763, %v763
  %v1026 = vunpack.c.l.s4 1983009808
  %v1027 = vunpack.c.0.s8 %v1026
  %v1028 = vlaneseq
  %v1029 = vshrl.u32 %v1028, 7
  %v1030 = vsub.s32 %v1027, %v1029
  %v1031 = vrot.slane %v1024, %v1030
  %v1034 = vunpack.c.l.s4 1983009808
  %v1035 = vunpack.c.0.s8 %v1034
  %v1036 = vlaneseq
  %v1037 = vshrl.u32 %v1036, 7
  %v1038 = vsub.s32 %v1035, %v1037
  %v1039 = vrot.slane %v879, %v1038
  %v1040 = vcombine.low %v1039, %v1039
  %v1043 = vcombine.low %v995, %v995
  %v1045 = vunpack.c.l.s4 1983009808
  %v1046 = vunpack.c.0.s8 %v1045
  %v1047 = vlaneseq
  %v1048 = vshrl.u32 %v1047, 7
  %v1049 = vsub.s32 %v1046, %v1048
  %v1050 = vrot.slane %v1043, %v1049
  %v1051 = vcombine.low %v1050, %v1050
  %vm1053 = vcmask 1041408
  %v1054 = vsel %vm1053, %v183, %v1003
  %vm1055 = vcmask 1043456
  %v1056 = vsel %vm1055, %v1054, %v1012
  %vm1057 = vcmask 1045504
  %v1058 = vsel %vm1057, %v1056, %v1022
  %v1059 = vsel %vm1053, %v647, %v1031
  %v1060 = vsel %vm1055, %v1059, %v1040
  %v1061 = vsel %vm1057, %v1060, %v1051
  %v1062 = vld [vmem:[%s4] sm:$0x3]
  %v1064 = vlaneseq
  %v1065 = vshrl.u32 %v1064, 7
  %v1066 = vsub.s32 0, %v1065
  %v1067 = vrot.slane %v1062, %v1066
  %v1068 = vlaneseq
  %v1069 = vshrl.u32 %v1068, 7
  %v1070 = vsub.s32 1, %v1069
  %v1071 = vrot.slane %v1062, %v1070
  %v1075 = vsel %vm69, %v1058, 0
  %v1078 = vsel %vm69, %v1061, 0
  %1080 = vmatprep.subr.mxu0 0.0
  %1081 = vmatpush1.msra.mxu0 0.0
  %1082 = vmatprep.subr.mxu0 0.0
  %1083 = vmatpush1.msra.mxu0 0.0
  %1084 = vmatprep.subr.mxu0 0.0
  %1085 = vmatpush1.msra.mxu0 0.0
  %1086 = vmatprep.subr.mxu0 0.0
  %1087 = vmatpush1.msra.mxu0 0.0
  %1088 = vmatprep.subr.mxu0 0.0
  %1089 = vmatpush1.msra.mxu0 0.0
  %1090 = vmatprep.subr.mxu0 0.0
  %1091 = vmatpush1.msra.mxu0 0.0
  %1092 = vmatprep.subr.mxu0 0.0
  %1093 = vmatpush1.msra.mxu0 0.0
  %1094 = vmatprep.subr.mxu0 0.0
  %1095 = vmatpush1.msra.mxu0 0.0
  %1096 = vmatprep.subr.mxu0 %v51
  %1097 = vmatpush1.msra.mxu0 %v50
  %1098 = vmatprep.subr.mxu0 %v49
  %1099 = vmatpush1.msra.mxu0 %v48
  %1100 = vmatprep.subr.mxu0 %v47
  %1101 = vmatpush1.msra.mxu0 %v46
  %1102 = vmatprep.subr.mxu0 %v45
  %1103 = vmatpush1.msra.mxu0 %v44
  %1104 = vmatprep.subr.mxu0 %v43
  %1105 = vmatpush1.msra.mxu0 %v42
  %1106 = vmatprep.subr.mxu0 %v41
  %1107 = vmatpush1.msra.mxu0 %v40
  %1108 = vmatprep.subr.mxu0 %v39
  %1109 = vmatpush1.msra.mxu0 %v38
  %1110 = vmatprep.subr.mxu0 %v37
  %1111 = vmatpush1.msra.mxu0 %v36
  %1112 = vmatprep.subr.mxu0 0.0
  %1113 = vmatpush2.msra.mxu0 0.0
  %1114 = vmatprep.subr.mxu0 0.0
  %1115 = vmatpush2.msra.mxu0 0.0
  %1116 = vmatprep.subr.mxu0 0.0
  %1117 = vmatpush2.msra.mxu0 0.0
  %1118 = vmatprep.subr.mxu0 0.0
  %1119 = vmatpush2.msra.mxu0 0.0
  %1120 = vmatprep.subr.mxu0 0.0
  %1121 = vmatpush2.msra.mxu0 0.0
  %1122 = vmatprep.subr.mxu0 0.0
  %1123 = vmatpush2.msra.mxu0 0.0
  %1124 = vmatprep.subr.mxu0 0.0
  %1125 = vmatpush2.msra.mxu0 0.0
  %1126 = vmatprep.subr.mxu0 0.0
  %1127 = vmatpush2.msra.mxu0 0.0
  %1128 = vmatprep.subr.mxu0 0.0
  %1129 = vmatpush2.msra.mxu0 0.0
  %1130 = vmatprep.subr.mxu0 0.0
  %1131 = vmatpush2.msra.mxu0 0.0
  %1132 = vmatprep.subr.mxu0 0.0
  %1133 = vmatpush2.msra.mxu0 0.0
  %1134 = vmatprep.subr.mxu0 0.0
  %1135 = vmatpush2.msra.mxu0 0.0
  %1136 = vmatprep.subr.mxu0 0.0
  %1137 = vmatpush2.msra.mxu0 0.0
  %1138 = vmatprep.subr.mxu0 0.0
  %1139 = vmatpush2.msra.mxu0 0.0
  %1140 = vmatprep.subr.mxu0 0.0
  %1141 = vmatpush2.msra.mxu0 0.0
  %1142 = vmatprep.subr.mxu0 0.0
  %1143 = vmatpush2.msra.mxu0 0.0
  %1144 = vmatprep.mubr.f32.mxu0 0.0
  %1145 = vmatmul.mubr.f32.gmra.mxu0 %v1075
  %v1146 = vpop.f32.mrf.mxu0
  %v1147 = vadd.f32 %v1067, %v1146
  %v1148 = vpop.f32.mrf.mxu0
  %v1149 = vadd.f32 %v1071, %v1148
  %1150 = vmatprep.mubr.f32.mxu0 0.0
  %1151 = vmatmul.mubr.f32.gmra.mxu0 %v1078
  %v1152 = vpop.f32.mrf.mxu0
  %v1153 = vadd.f32 %v1067, %v1152
  %v1154 = vpop.f32.mrf.mxu0
  %v1155 = vadd.f32 %v1071, %v1154
  %1156 = vdwg.mxu0
  %1157 = vmatprep.subr.mxu0 0.0
  %1158 = vmatpush1.msra.mxu0 0.0
  %1159 = vmatprep.subr.mxu0 0.0
  %1160 = vmatpush1.msra.mxu0 0.0
  %1161 = vmatprep.subr.mxu0 0.0
  %1162 = vmatpush1.msra.mxu0 0.0
  %1163 = vmatprep.subr.mxu0 0.0
  %1164 = vmatpush1.msra.mxu0 0.0
  %1165 = vmatprep.subr.mxu0 0.0
  %1166 = vmatpush1.msra.mxu0 0.0
  %1167 = vmatprep.subr.mxu0 0.0
  %1168 = vmatpush1.msra.mxu0 0.0
  %1169 = vmatprep.subr.mxu0 0.0
  %1170 = vmatpush1.msra.mxu0 0.0
  %1171 = vmatprep.subr.mxu0 0.0
  %1172 = vmatpush1.msra.mxu0 0.0
  %1173 = vmatprep.subr.mxu0 %v67
  %1174 = vmatpush1.msra.mxu0 %v66
  %1175 = vmatprep.subr.mxu0 %v65
  %1176 = vmatpush1.msra.mxu0 %v64
  %1177 = vmatprep.subr.mxu0 %v63
  %1178 = vmatpush1.msra.mxu0 %v62
  %1179 = vmatprep.subr.mxu0 %v61
  %1180 = vmatpush1.msra.mxu0 %v60
  %1181 = vmatprep.subr.mxu0 %v59
  %1182 = vmatpush1.msra.mxu0 %v58
  %1183 = vmatprep.subr.mxu0 %v57
  %1184 = vmatpush1.msra.mxu0 %v56
  %1185 = vmatprep.subr.mxu0 %v55
  %1186 = vmatpush1.msra.mxu0 %v54
  %1187 = vmatprep.subr.mxu0 %v53
  %1188 = vmatpush1.msra.mxu0 %v52
  %1189 = vmatprep.subr.mxu0 0.0
  %1190 = vmatpush2.msra.mxu0 0.0
  %1191 = vmatprep.subr.mxu0 0.0
  %1192 = vmatpush2.msra.mxu0 0.0
  %1193 = vmatprep.subr.mxu0 0.0
  %1194 = vmatpush2.msra.mxu0 0.0
  %1195 = vmatprep.subr.mxu0 0.0
  %1196 = vmatpush2.msra.mxu0 0.0
  %1197 = vmatprep.subr.mxu0 0.0
  %1198 = vmatpush2.msra.mxu0 0.0
  %1199 = vmatprep.subr.mxu0 0.0
  %1200 = vmatpush2.msra.mxu0 0.0
  %1201 = vmatprep.subr.mxu0 0.0
  %1202 = vmatpush2.msra.mxu0 0.0
  %1203 = vmatprep.subr.mxu0 0.0
  %1204 = vmatpush2.msra.mxu0 0.0
  %1205 = vmatprep.subr.mxu0 0.0
  %1206 = vmatpush2.msra.mxu0 0.0
  %1207 = vmatprep.subr.mxu0 0.0
  %1208 = vmatpush2.msra.mxu0 0.0
  %1209 = vmatprep.subr.mxu0 0.0
  %1210 = vmatpush2.msra.mxu0 0.0
  %1211 = vmatprep.subr.mxu0 0.0
  %1212 = vmatpush2.msra.mxu0 0.0
  %1213 = vmatprep.subr.mxu0 0.0
  %1214 = vmatpush2.msra.mxu0 0.0
  %1215 = vmatprep.subr.mxu0 0.0
  %1216 = vmatpush2.msra.mxu0 0.0
  %1217 = vmatprep.subr.mxu0 0.0
  %1218 = vmatpush2.msra.mxu0 0.0
  %1219 = vmatprep.subr.mxu0 0.0
  %1220 = vmatpush2.msra.mxu0 0.0
  %1221 = vmatprep.mubr.f32.mxu0 0.0
  %1222 = vmatmul.mubr.f32.gmra.mxu0 %v71
  %v1223 = vpop.f32.mrf.mxu0
  %v1224 = vadd.f32 0.0, %v1223
  %v1225 = vpop.f32.mrf.mxu0
  %v1226 = vadd.f32 0.0, %v1225
  %1227 = vdwg.mxu0
  %v1228 = vadd.f32 %v1147, %v1224
  %v1229 = vadd.f32 %v1149, %v1226
  %v1230 = vxor.u32 %v1228, 2147483648
  %v1231 = vxor.u32 %v1229, 2147483648
  %v1232 = vmul.f32 %v1230, 1.442695
  %v1233 = vpow.pop %v1232
  %v1234 = vmul.f32 %v1231, 1.442695
  %v1235 = vpow.pop %v1234
  %v1236 = vadd.f32 %v1233, 1.0
  %v1237 = vadd.f32 %v1235, 1.0
  %v1238 = vrcp.pop %v1236
  %v1239 = vmul.f32 1.0, %v1238
  %v1240 = vrcp.pop %v1237
  %v1241 = vmul.f32 1.0, %v1240
  %v1242 = vtanh.pop %v1229
  %v1243 = vmul.f32 %v1239, 0.0
  %1245 = vrot.lane.b32.xlu0 %v1242, 64
  %v1246 = vpop.permute.xlu0 %1245
  %v1248 = vmul.f32 %v1239, %v1246
  %1250 = vrot.lane.b32.xlu0 %v1248, 64
  %v1251 = vpop.permute.xlu0 %1250
  %v1253 = vadd.f32 %v1243, %v1251
  %v1254 = vtanh.pop %v1253
  %1256 = vrot.lane.b32.xlu0 %v1254, 64
  %v1257 = vpop.permute.xlu0 %1256
  %v1259 = vmul.f32 %v1241, %v1257
  %v1261 = vsel %vm69, %v1259, 0
  %1263 = vmatprep.subr.mxu0 0.0
  %1264 = vmatpush1.msra.mxu0 0.0
  %1265 = vmatprep.subr.mxu0 0.0
  %1266 = vmatpush1.msra.mxu0 0.0
  %1267 = vmatprep.subr.mxu0 0.0
  %1268 = vmatpush1.msra.mxu0 0.0
  %1269 = vmatprep.subr.mxu0 0.0
  %1270 = vmatpush1.msra.mxu0 0.0
  %1271 = vmatprep.subr.mxu0 0.0
  %1272 = vmatpush1.msra.mxu0 0.0
  %1273 = vmatprep.subr.mxu0 0.0
  %1274 = vmatpush1.msra.mxu0 0.0
  %1275 = vmatprep.subr.mxu0 0.0
  %1276 = vmatpush1.msra.mxu0 0.0
  %1277 = vmatprep.subr.mxu0 0.0
  %1278 = vmatpush1.msra.mxu0 0.0
  %1279 = vmatprep.subr.mxu0 %v67
  %1280 = vmatpush1.msra.mxu0 %v66
  %1281 = vmatprep.subr.mxu0 %v65
  %1282 = vmatpush1.msra.mxu0 %v64
  %1283 = vmatprep.subr.mxu0 %v63
  %1284 = vmatpush1.msra.mxu0 %v62
  %1285 = vmatprep.subr.mxu0 %v61
  %1286 = vmatpush1.msra.mxu0 %v60
  %1287 = vmatprep.subr.mxu0 %v59
  %1288 = vmatpush1.msra.mxu0 %v58
  %1289 = vmatprep.subr.mxu0 %v57
  %1290 = vmatpush1.msra.mxu0 %v56
  %1291 = vmatprep.subr.mxu0 %v55
  %1292 = vmatpush1.msra.mxu0 %v54
  %1293 = vmatprep.subr.mxu0 %v53
  %1294 = vmatpush1.msra.mxu0 %v52
  %1295 = vmatprep.subr.mxu0 0.0
  %1296 = vmatpush2.msra.mxu0 0.0
  %1297 = vmatprep.subr.mxu0 0.0
  %1298 = vmatpush2.msra.mxu0 0.0
  %1299 = vmatprep.subr.mxu0 0.0
  %1300 = vmatpush2.msra.mxu0 0.0
  %1301 = vmatprep.subr.mxu0 0.0
  %1302 = vmatpush2.msra.mxu0 0.0
  %1303 = vmatprep.subr.mxu0 0.0
  %1304 = vmatpush2.msra.mxu0 0.0
  %1305 = vmatprep.subr.mxu0 0.0
  %1306 = vmatpush2.msra.mxu0 0.0
  %1307 = vmatprep.subr.mxu0 0.0
  %1308 = vmatpush2.msra.mxu0 0.0
  %1309 = vmatprep.subr.mxu0 0.0
  %1310 = vmatpush2.msra.mxu0 0.0
  %1311 = vmatprep.subr.mxu0 0.0
  %1312 = vmatpush2.msra.mxu0 0.0
  %1313 = vmatprep.subr.mxu0 0.0
  %1314 = vmatpush2.msra.mxu0 0.0
  %1315 = vmatprep.subr.mxu0 0.0
  %1316 = vmatpush2.msra.mxu0 0.0
  %1317 = vmatprep.subr.mxu0 0.0
  %1318 = vmatpush2.msra.mxu0 0.0
  %1319 = vmatprep.subr.mxu0 0.0
  %1320 = vmatpush2.msra.mxu0 0.0
  %1321 = vmatprep.subr.mxu0 0.0
  %1322 = vmatpush2.msra.mxu0 0.0
  %1323 = vmatprep.subr.mxu0 0.0
  %1324 = vmatpush2.msra.mxu0 0.0
  %1325 = vmatprep.subr.mxu0 0.0
  %1326 = vmatpush2.msra.mxu0 0.0
  %1327 = vmatprep.mubr.f32.mxu0 0.0
  %1328 = vmatmul.mubr.f32.gmra.mxu0 %v1261
  %v1329 = vpop.f32.mrf.mxu0
  %v1330 = vadd.f32 0.0, %v1329
  %v1331 = vpop.f32.mrf.mxu0
  %v1332 = vadd.f32 0.0, %v1331
  %1333 = vdwg.mxu0
  %v1336 = vrot.slane %v1330, 6
  %v1337 = vrot.slane %v1332, 6
  %v1340 = vadd.f32 %v1147, %v1336
  %v1341 = vadd.f32 %v1149, %v1337
  %v1342 = vxor.u32 %v1340, 2147483648
  %v1343 = vxor.u32 %v1341, 2147483648
  %v1344 = vmul.f32 %v1342, 1.442695
  %v1345 = vpow.pop %v1344
  %v1346 = vmul.f32 %v1343, 1.442695
  %v1347 = vpow.pop %v1346
  %v1348 = vadd.f32 %v1345, 1.0
  %v1349 = vadd.f32 %v1347, 1.0
  %v1350 = vrcp.pop %v1348
  %v1351 = vmul.f32 1.0, %v1350
  %v1352 = vrcp.pop %v1349
  %v1353 = vmul.f32 1.0, %v1352
  %v1354 = vtanh.pop %v1341
  %v1356 = vrot.slane %v1253, 6
  %v1358 = vmul.f32 %v1351, %v1356
  %1360 = vrot.lane.b32.xlu0 %v1354, 64
  %v1361 = vpop.permute.xlu0 %1360
  %v1363 = vmul.f32 %v1351, %v1361
  %1365 = vrot.lane.b32.xlu0 %v1363, 64
  %v1366 = vpop.permute.xlu0 %1365
  %v1368 = vadd.f32 %v1358, %v1366
  %v1369 = vtanh.pop %v1368
  %1371 = vrot.lane.b32.xlu0 %v1369, 64
  %v1372 = vpop.permute.xlu0 %1371
  %v1374 = vmul.f32 %v1353, %v1372
  %v1376 = vrot.slane %v1374, 2
  %v1377 = vsel %vm69, %v1376, 0
  %1379 = vmatprep.subr.mxu0 0.0
  %1380 = vmatpush1.msra.mxu0 0.0
  %1381 = vmatprep.subr.mxu0 0.0
  %1382 = vmatpush1.msra.mxu0 0.0
  %1383 = vmatprep.subr.mxu0 0.0
  %1384 = vmatpush1.msra.mxu0 0.0
  %1385 = vmatprep.subr.mxu0 0.0
  %1386 = vmatpush1.msra.mxu0 0.0
  %1387 = vmatprep.subr.mxu0 0.0
  %1388 = vmatpush1.msra.mxu0 0.0
  %1389 = vmatprep.subr.mxu0 0.0
  %1390 = vmatpush1.msra.mxu0 0.0
  %1391 = vmatprep.subr.mxu0 0.0
  %1392 = vmatpush1.msra.mxu0 0.0
  %1393 = vmatprep.subr.mxu0 0.0
  %1394 = vmatpush1.msra.mxu0 0.0
  %1395 = vmatprep.subr.mxu0 %v67
  %1396 = vmatpush1.msra.mxu0 %v66
  %1397 = vmatprep.subr.mxu0 %v65
  %1398 = vmatpush1.msra.mxu0 %v64
  %1399 = vmatprep.subr.mxu0 %v63
  %1400 = vmatpush1.msra.mxu0 %v62
  %1401 = vmatprep.subr.mxu0 %v61
  %1402 = vmatpush1.msra.mxu0 %v60
  %1403 = vmatprep.subr.mxu0 %v59
  %1404 = vmatpush1.msra.mxu0 %v58
  %1405 = vmatprep.subr.mxu0 %v57
  %1406 = vmatpush1.msra.mxu0 %v56
  %1407 = vmatprep.subr.mxu0 %v55
  %1408 = vmatpush1.msra.mxu0 %v54
  %1409 = vmatprep.subr.mxu0 %v53
  %1410 = vmatpush1.msra.mxu0 %v52
  %1411 = vmatprep.subr.mxu0 0.0
  %1412 = vmatpush2.msra.mxu0 0.0
  %1413 = vmatprep.subr.mxu0 0.0
  %1414 = vmatpush2.msra.mxu0 0.0
  %1415 = vmatprep.subr.mxu0 0.0
  %1416 = vmatpush2.msra.mxu0 0.0
  %1417 = vmatprep.subr.mxu0 0.0
  %1418 = vmatpush2.msra.mxu0 0.0
  %1419 = vmatprep.subr.mxu0 0.0
  %1420 = vmatpush2.msra.mxu0 0.0
  %1421 = vmatprep.subr.mxu0 0.0
  %1422 = vmatpush2.msra.mxu0 0.0
  %1423 = vmatprep.subr.mxu0 0.0
  %1424 = vmatpush2.msra.mxu0 0.0
  %1425 = vmatprep.subr.mxu0 0.0
  %1426 = vmatpush2.msra.mxu0 0.0
  %1427 = vmatprep.subr.mxu0 0.0
  %1428 = vmatpush2.msra.mxu0 0.0
  %1429 = vmatprep.subr.mxu0 0.0
  %1430 = vmatpush2.msra.mxu0 0.0
  %1431 = vmatprep.subr.mxu0 0.0
  %1432 = vmatpush2.msra.mxu0 0.0
  %1433 = vmatprep.subr.mxu0 0.0
  %1434 = vmatpush2.msra.mxu0 0.0
  %1435 = vmatprep.subr.mxu0 0.0
  %1436 = vmatpush2.msra.mxu0 0.0
  %1437 = vmatprep.subr.mxu0 0.0
  %1438 = vmatpush2.msra.mxu0 0.0
  %1439 = vmatprep.subr.mxu0 0.0
  %1440 = vmatpush2.msra.mxu0 0.0
  %1441 = vmatprep.subr.mxu0 0.0
  %1442 = vmatpush2.msra.mxu0 0.0
  %1443 = vmatprep.mubr.f32.mxu0 0.0
  %1444 = vmatmul.mubr.f32.gmra.mxu0 %v1377
  %v1445 = vpop.f32.mrf.mxu0
  %v1446 = vadd.f32 0.0, %v1445
  %v1447 = vpop.f32.mrf.mxu0
  %v1448 = vadd.f32 0.0, %v1447
  %1449 = vdwg.mxu0
  %v1452 = vrot.slane %v1446, 4
  %v1453 = vrot.slane %v1448, 4
  %v1456 = vadd.f32 %v1147, %v1452
  %v1457 = vadd.f32 %v1149, %v1453
  %v1458 = vxor.u32 %v1456, 2147483648
  %v1459 = vxor.u32 %v1457, 2147483648
  %v1460 = vmul.f32 %v1458, 1.442695
  %v1461 = vpow.pop %v1460
  %v1462 = vmul.f32 %v1459, 1.442695
  %v1463 = vpow.pop %v1462
  %v1464 = vadd.f32 %v1461, 1.0
  %v1465 = vadd.f32 %v1463, 1.0
  %v1466 = vrcp.pop %v1464
  %v1467 = vmul.f32 1.0, %v1466
  %v1468 = vrcp.pop %v1465
  %v1469 = vmul.f32 1.0, %v1468
  %v1470 = vtanh.pop %v1457
  %v1472 = vrot.slane %v1368, 6
  %v1474 = vmul.f32 %v1467, %v1472
  %1476 = vrot.lane.b32.xlu0 %v1470, 64
  %v1477 = vpop.permute.xlu0 %1476
  %v1479 = vmul.f32 %v1467, %v1477
  %1481 = vrot.lane.b32.xlu0 %v1479, 64
  %v1482 = vpop.permute.xlu0 %1481
  %v1484 = vadd.f32 %v1474, %v1482
  %v1485 = vtanh.pop %v1484
  %1487 = vrot.lane.b32.xlu0 %v1485, 64
  %v1488 = vpop.permute.xlu0 %1487
  %v1490 = vmul.f32 %v1469, %v1488
  %v1492 = vrot.slane %v1490, 4
  %v1493 = vsel %vm69, %v1492, 0
  %1495 = vmatprep.subr.mxu0 0.0
  %1496 = vmatpush1.msra.mxu0 0.0
  %1497 = vmatprep.subr.mxu0 0.0
  %1498 = vmatpush1.msra.mxu0 0.0
  %1499 = vmatprep.subr.mxu0 0.0
  %1500 = vmatpush1.msra.mxu0 0.0
  %1501 = vmatprep.subr.mxu0 0.0
  %1502 = vmatpush1.msra.mxu0 0.0
  %1503 = vmatprep.subr.mxu0 0.0
  %1504 = vmatpush1.msra.mxu0 0.0
  %1505 = vmatprep.subr.mxu0 0.0
  %1506 = vmatpush1.msra.mxu0 0.0
  %1507 = vmatprep.subr.mxu0 0.0
  %1508 = vmatpush1.msra.mxu0 0.0
  %1509 = vmatprep.subr.mxu0 0.0
  %1510 = vmatpush1.msra.mxu0 0.0
  %1511 = vmatprep.subr.mxu0 %v67
  %1512 = vmatpush1.msra.mxu0 %v66
  %1513 = vmatprep.subr.mxu0 %v65
  %1514 = vmatpush1.msra.mxu0 %v64
  %1515 = vmatprep.subr.mxu0 %v63
  %1516 = vmatpush1.msra.mxu0 %v62
  %1517 = vmatprep.subr.mxu0 %v61
  %1518 = vmatpush1.msra.mxu0 %v60
  %1519 = vmatprep.subr.mxu0 %v59
  %1520 = vmatpush1.msra.mxu0 %v58
  %1521 = vmatprep.subr.mxu0 %v57
  %1522 = vmatpush1.msra.mxu0 %v56
  %1523 = vmatprep.subr.mxu0 %v55
  %1524 = vmatpush1.msra.mxu0 %v54
  %1525 = vmatprep.subr.mxu0 %v53
  %1526 = vmatpush1.msra.mxu0 %v52
  %1527 = vmatprep.subr.mxu0 0.0
  %1528 = vmatpush2.msra.mxu0 0.0
  %1529 = vmatprep.subr.mxu0 0.0
  %1530 = vmatpush2.msra.mxu0 0.0
  %1531 = vmatprep.subr.mxu0 0.0
  %1532 = vmatpush2.msra.mxu0 0.0
  %1533 = vmatprep.subr.mxu0 0.0
  %1534 = vmatpush2.msra.mxu0 0.0
  %1535 = vmatprep.subr.mxu0 0.0
  %1536 = vmatpush2.msra.mxu0 0.0
  %1537 = vmatprep.subr.mxu0 0.0
  %1538 = vmatpush2.msra.mxu0 0.0
  %1539 = vmatprep.subr.mxu0 0.0
  %1540 = vmatpush2.msra.mxu0 0.0
  %1541 = vmatprep.subr.mxu0 0.0
  %1542 = vmatpush2.msra.mxu0 0.0
  %1543 = vmatprep.subr.mxu0 0.0
  %1544 = vmatpush2.msra.mxu0 0.0
  %1545 = vmatprep.subr.mxu0 0.0
  %1546 = vmatpush2.msra.mxu0 0.0
  %1547 = vmatprep.subr.mxu0 0.0
  %1548 = vmatpush2.msra.mxu0 0.0
  %1549 = vmatprep.subr.mxu0 0.0
  %1550 = vmatpush2.msra.mxu0 0.0
  %1551 = vmatprep.subr.mxu0 0.0
  %1552 = vmatpush2.msra.mxu0 0.0
  %1553 = vmatprep.subr.mxu0 0.0
  %1554 = vmatpush2.msra.mxu0 0.0
  %1555 = vmatprep.subr.mxu0 0.0
  %1556 = vmatpush2.msra.mxu0 0.0
  %1557 = vmatprep.subr.mxu0 0.0
  %1558 = vmatpush2.msra.mxu0 0.0
  %1559 = vmatprep.mubr.f32.mxu0 0.0
  %1560 = vmatmul.mubr.f32.gmra.mxu0 %v1493
  %v1561 = vpop.f32.mrf.mxu0
  %v1562 = vadd.f32 0.0, %v1561
  %v1563 = vpop.f32.mrf.mxu0
  %v1564 = vadd.f32 0.0, %v1563
  %1565 = vdwg.mxu0
  %v1568 = vrot.slane %v1562, 2
  %v1569 = vrot.slane %v1564, 2
  %v1572 = vadd.f32 %v1147, %v1568
  %v1573 = vadd.f32 %v1149, %v1569
  %v1574 = vxor.u32 %v1572, 2147483648
  %v1575 = vxor.u32 %v1573, 2147483648
  %v1576 = vmul.f32 %v1574, 1.442695
  %v1577 = vpow.pop %v1576
  %v1578 = vmul.f32 %v1575, 1.442695
  %v1579 = vpow.pop %v1578
  %v1580 = vadd.f32 %v1577, 1.0
  %v1581 = vadd.f32 %v1579, 1.0
  %v1582 = vrcp.pop %v1580
  %v1583 = vmul.f32 1.0, %v1582
  %v1584 = vrcp.pop %v1581
  %v1585 = vmul.f32 1.0, %v1584
  %v1586 = vtanh.pop %v1573
  %v1588 = vrot.slane %v1484, 6
  %v1590 = vmul.f32 %v1583, %v1588
  %1592 = vrot.lane.b32.xlu0 %v1586, 64
  %v1593 = vpop.permute.xlu0 %1592
  %v1595 = vmul.f32 %v1583, %v1593
  %1597 = vrot.lane.b32.xlu0 %v1595, 64
  %v1598 = vpop.permute.xlu0 %1597
  %v1600 = vadd.f32 %v1590, %v1598
  %v1601 = vtanh.pop %v1600
  %1603 = vrot.lane.b32.xlu0 %v1601, 64
  %v1604 = vpop.permute.xlu0 %1603
  %v1606 = vmul.f32 %v1585, %v1604
  %v1608 = vrot.slane %v1606, 6
  %v1609 = vsel %vm69, %v1608, 0
  %1611 = vmatprep.subr.mxu0 0.0
  %1612 = vmatpush1.msra.mxu0 0.0
  %1613 = vmatprep.subr.mxu0 0.0
  %1614 = vmatpush1.msra.mxu0 0.0
  %1615 = vmatprep.subr.mxu0 0.0
  %1616 = vmatpush1.msra.mxu0 0.0
  %1617 = vmatprep.subr.mxu0 0.0
  %1618 = vmatpush1.msra.mxu0 0.0
  %1619 = vmatprep.subr.mxu0 0.0
  %1620 = vmatpush1.msra.mxu0 0.0
  %1621 = vmatprep.subr.mxu0 0.0
  %1622 = vmatpush1.msra.mxu0 0.0
  %1623 = vmatprep.subr.mxu0 0.0
  %1624 = vmatpush1.msra.mxu0 0.0
  %1625 = vmatprep.subr.mxu0 0.0
  %1626 = vmatpush1.msra.mxu0 0.0
  %1627 = vmatprep.subr.mxu0 %v67
  %1628 = vmatpush1.msra.mxu0 %v66
  %1629 = vmatprep.subr.mxu0 %v65
  %1630 = vmatpush1.msra.mxu0 %v64
  %1631 = vmatprep.subr.mxu0 %v63
  %1632 = vmatpush1.msra.mxu0 %v62
  %1633 = vmatprep.subr.mxu0 %v61
  %1634 = vmatpush1.msra.mxu0 %v60
  %1635 = vmatprep.subr.mxu0 %v59
  %1636 = vmatpush1.msra.mxu0 %v58
  %1637 = vmatprep.subr.mxu0 %v57
  %1638 = vmatpush1.msra.mxu0 %v56
  %1639 = vmatprep.subr.mxu0 %v55
  %1640 = vmatpush1.msra.mxu0 %v54
  %1641 = vmatprep.subr.mxu0 %v53
  %1642 = vmatpush1.msra.mxu0 %v52
  %1643 = vmatprep.subr.mxu0 0.0
  %1644 = vmatpush2.msra.mxu0 0.0
  %1645 = vmatprep.subr.mxu0 0.0
  %1646 = vmatpush2.msra.mxu0 0.0
  %1647 = vmatprep.subr.mxu0 0.0
  %1648 = vmatpush2.msra.mxu0 0.0
  %1649 = vmatprep.subr.mxu0 0.0
  %1650 = vmatpush2.msra.mxu0 0.0
  %1651 = vmatprep.subr.mxu0 0.0
  %1652 = vmatpush2.msra.mxu0 0.0
  %1653 = vmatprep.subr.mxu0 0.0
  %1654 = vmatpush2.msra.mxu0 0.0
  %1655 = vmatprep.subr.mxu0 0.0
  %1656 = vmatpush2.msra.mxu0 0.0
  %1657 = vmatprep.subr.mxu0 0.0
  %1658 = vmatpush2.msra.mxu0 0.0
  %1659 = vmatprep.subr.mxu0 0.0
  %1660 = vmatpush2.msra.mxu0 0.0
  %1661 = vmatprep.subr.mxu0 0.0
  %1662 = vmatpush2.msra.mxu0 0.0
  %1663 = vmatprep.subr.mxu0 0.0
  %1664 = vmatpush2.msra.mxu0 0.0
  %1665 = vmatprep.subr.mxu0 0.0
  %1666 = vmatpush2.msra.mxu0 0.0
  %1667 = vmatprep.subr.mxu0 0.0
  %1668 = vmatpush2.msra.mxu0 0.0
  %1669 = vmatprep.subr.mxu0 0.0
  %1670 = vmatpush2.msra.mxu0 0.0
  %1671 = vmatprep.subr.mxu0 0.0
  %1672 = vmatpush2.msra.mxu0 0.0
  %1673 = vmatprep.subr.mxu0 0.0
  %1674 = vmatpush2.msra.mxu0 0.0
  %1675 = vmatprep.mubr.f32.mxu0 0.0
  %1676 = vmatmul.mubr.f32.gmra.mxu0 %v1609
  %v1677 = vpop.f32.mrf.mxu0
  %v1678 = vadd.f32 0.0, %v1677
  %v1679 = vpop.f32.mrf.mxu0
  %v1680 = vadd.f32 0.0, %v1679
  %1681 = vdwg.mxu0
  %v1682 = vadd.f32 %v1153, %v1678
  %v1683 = vadd.f32 %v1155, %v1680
  %v1684 = vxor.u32 %v1682, 2147483648
  %v1685 = vxor.u32 %v1683, 2147483648
  %v1686 = vmul.f32 %v1684, 1.442695
  %v1687 = vpow.pop %v1686
  %v1688 = vmul.f32 %v1685, 1.442695
  %v1689 = vpow.pop %v1688
  %v1690 = vadd.f32 %v1687, 1.0
  %v1691 = vadd.f32 %v1689, 1.0
  %v1692 = vrcp.pop %v1690
  %v1693 = vmul.f32 1.0, %v1692
  %v1694 = vrcp.pop %v1691
  %v1695 = vmul.f32 1.0, %v1694
  %v1696 = vtanh.pop %v1683
  %v1698 = vrot.slane %v1600, 6
  %v1700 = vmul.f32 %v1693, %v1698
  %1702 = vrot.lane.b32.xlu0 %v1696, 64
  %v1703 = vpop.permute.xlu0 %1702
  %v1705 = vmul.f32 %v1693, %v1703
  %1707 = vrot.lane.b32.xlu0 %v1705, 64
  %v1708 = vpop.permute.xlu0 %1707
  %v1710 = vadd.f32 %v1700, %v1708
  %v1711 = vtanh.pop %v1710
  %1713 = vrot.lane.b32.xlu0 %v1711, 64
  %v1714 = vpop.permute.xlu0 %1713
  %v1716 = vmul.f32 %v1695, %v1714
  %v1718 = vsel %vm69, %v1716, 0
  %1720 = vmatprep.subr.mxu0 0.0
  %1721 = vmatpush1.msra.mxu0 0.0
  %1722 = vmatprep.subr.mxu0 0.0
  %1723 = vmatpush1.msra.mxu0 0.0
  %1724 = vmatprep.subr.mxu0 0.0
  %1725 = vmatpush1.msra.mxu0 0.0
  %1726 = vmatprep.subr.mxu0 0.0
  %1727 = vmatpush1.msra.mxu0 0.0
  %1728 = vmatprep.subr.mxu0 0.0
  %1729 = vmatpush1.msra.mxu0 0.0
  %1730 = vmatprep.subr.mxu0 0.0
  %1731 = vmatpush1.msra.mxu0 0.0
  %1732 = vmatprep.subr.mxu0 0.0
  %1733 = vmatpush1.msra.mxu0 0.0
  %1734 = vmatprep.subr.mxu0 0.0
  %1735 = vmatpush1.msra.mxu0 0.0
  %1736 = vmatprep.subr.mxu0 %v67
  %1737 = vmatpush1.msra.mxu0 %v66
  %1738 = vmatprep.subr.mxu0 %v65
  %1739 = vmatpush1.msra.mxu0 %v64
  %1740 = vmatprep.subr.mxu0 %v63
  %1741 = vmatpush1.msra.mxu0 %v62
  %1742 = vmatprep.subr.mxu0 %v61
  %1743 = vmatpush1.msra.mxu0 %v60
  %1744 = vmatprep.subr.mxu0 %v59
  %1745 = vmatpush1.msra.mxu0 %v58
  %1746 = vmatprep.subr.mxu0 %v57
  %1747 = vmatpush1.msra.mxu0 %v56
  %1748 = vmatprep.subr.mxu0 %v55
  %1749 = vmatpush1.msra.mxu0 %v54
  %1750 = vmatprep.subr.mxu0 %v53
  %1751 = vmatpush1.msra.mxu0 %v52
  %1752 = vmatprep.subr.mxu0 0.0
  %1753 = vmatpush2.msra.mxu0 0.0
  %1754 = vmatprep.subr.mxu0 0.0
  %1755 = vmatpush2.msra.mxu0 0.0
  %1756 = vmatprep.subr.mxu0 0.0
  %1757 = vmatpush2.msra.mxu0 0.0
  %1758 = vmatprep.subr.mxu0 0.0
  %1759 = vmatpush2.msra.mxu0 0.0
  %1760 = vmatprep.subr.mxu0 0.0
  %1761 = vmatpush2.msra.mxu0 0.0
  %1762 = vmatprep.subr.mxu0 0.0
  %1763 = vmatpush2.msra.mxu0 0.0
  %1764 = vmatprep.subr.mxu0 0.0
  %1765 = vmatpush2.msra.mxu0 0.0
  %1766 = vmatprep.subr.mxu0 0.0
  %1767 = vmatpush2.msra.mxu0 0.0
  %1768 = vmatprep.subr.mxu0 0.0
  %1769 = vmatpush2.msra.mxu0 0.0
  %1770 = vmatprep.subr.mxu0 0.0
  %1771 = vmatpush2.msra.mxu0 0.0
  %1772 = vmatprep.subr.mxu0 0.0
  %1773 = vmatpush2.msra.mxu0 0.0
  %1774 = vmatprep.subr.mxu0 0.0
  %1775 = vmatpush2.msra.mxu0 0.0
  %1776 = vmatprep.subr.mxu0 0.0
  %1777 = vmatpush2.msra.mxu0 0.0
  %1778 = vmatprep.subr.mxu0 0.0
  %1779 = vmatpush2.msra.mxu0 0.0
  %1780 = vmatprep.subr.mxu0 0.0
  %1781 = vmatpush2.msra.mxu0 0.0
  %1782 = vmatprep.subr.mxu0 0.0
  %1783 = vmatpush2.msra.mxu0 0.0
  %1784 = vmatprep.mubr.f32.mxu0 0.0
  %1785 = vmatmul.mubr.f32.gmra.mxu0 %v1718
  %v1786 = vpop.f32.mrf.mxu0
  %v1787 = vadd.f32 0.0, %v1786
  %v1788 = vpop.f32.mrf.mxu0
  %v1789 = vadd.f32 0.0, %v1788
  %1790 = vdwg.mxu0
  %v1793 = vrot.slane %v1787, 6
  %v1794 = vrot.slane %v1789, 6
  %v1797 = vadd.f32 %v1153, %v1793
  %v1798 = vadd.f32 %v1155, %v1794
  %v1799 = vxor.u32 %v1797, 2147483648
  %v1800 = vxor.u32 %v1798, 2147483648
  %v1801 = vmul.f32 %v1799, 1.442695
  %v1802 = vpow.pop %v1801
  %v1803 = vmul.f32 %v1800, 1.442695
  %v1804 = vpow.pop %v1803
  %v1805 = vadd.f32 %v1802, 1.0
  %v1806 = vadd.f32 %v1804, 1.0
  %v1807 = vrcp.pop %v1805
  %v1808 = vmul.f32 1.0, %v1807
  %v1809 = vrcp.pop %v1806
  %v1810 = vmul.f32 1.0, %v1809
  %v1811 = vtanh.pop %v1798
  %v1813 = vrot.slane %v1710, 6
  %v1815 = vmul.f32 %v1808, %v1813
  %1817 = vrot.lane.b32.xlu0 %v1811, 64
  %v1818 = vpop.permute.xlu0 %1817
  %v1820 = vmul.f32 %v1808, %v1818
  %1822 = vrot.lane.b32.xlu0 %v1820, 64
  %v1823 = vpop.permute.xlu0 %1822
  %v1825 = vadd.f32 %v1815, %v1823
  %v1826 = vtanh.pop %v1825
  %1828 = vrot.lane.b32.xlu0 %v1826, 64
  %v1829 = vpop.permute.xlu0 %1828
  %v1831 = vmul.f32 %v1810, %v1829
  %v1833 = vrot.slane %v1831, 2
  %v1834 = vsel %vm69, %v1833, 0
  %1836 = vmatprep.subr.mxu0 0.0
  %1837 = vmatpush1.msra.mxu0 0.0
  %1838 = vmatprep.subr.mxu0 0.0
  %1839 = vmatpush1.msra.mxu0 0.0
  %1840 = vmatprep.subr.mxu0 0.0
  %1841 = vmatpush1.msra.mxu0 0.0
  %1842 = vmatprep.subr.mxu0 0.0
  %1843 = vmatpush1.msra.mxu0 0.0
  %1844 = vmatprep.subr.mxu0 0.0
  %1845 = vmatpush1.msra.mxu0 0.0
  %1846 = vmatprep.subr.mxu0 0.0
  %1847 = vmatpush1.msra.mxu0 0.0
  %1848 = vmatprep.subr.mxu0 0.0
  %1849 = vmatpush1.msra.mxu0 0.0
  %1850 = vmatprep.subr.mxu0 0.0
  %1851 = vmatpush1.msra.mxu0 0.0
  %1852 = vmatprep.subr.mxu0 %v67
  %1853 = vmatpush1.msra.mxu0 %v66
  %1854 = vmatprep.subr.mxu0 %v65
  %1855 = vmatpush1.msra.mxu0 %v64
  %1856 = vmatprep.subr.mxu0 %v63
  %1857 = vmatpush1.msra.mxu0 %v62
  %1858 = vmatprep.subr.mxu0 %v61
  %1859 = vmatpush1.msra.mxu0 %v60
  %1860 = vmatprep.subr.mxu0 %v59
  %1861 = vmatpush1.msra.mxu0 %v58
  %1862 = vmatprep.subr.mxu0 %v57
  %1863 = vmatpush1.msra.mxu0 %v56
  %1864 = vmatprep.subr.mxu0 %v55
  %1865 = vmatpush1.msra.mxu0 %v54
  %1866 = vmatprep.subr.mxu0 %v53
  %1867 = vmatpush1.msra.mxu0 %v52
  %1868 = vmatprep.subr.mxu0 0.0
  %1869 = vmatpush2.msra.mxu0 0.0
  %1870 = vmatprep.subr.mxu0 0.0
  %1871 = vmatpush2.msra.mxu0 0.0
  %1872 = vmatprep.subr.mxu0 0.0
  %1873 = vmatpush2.msra.mxu0 0.0
  %1874 = vmatprep.subr.mxu0 0.0
  %1875 = vmatpush2.msra.mxu0 0.0
  %1876 = vmatprep.subr.mxu0 0.0
  %1877 = vmatpush2.msra.mxu0 0.0
  %1878 = vmatprep.subr.mxu0 0.0
  %1879 = vmatpush2.msra.mxu0 0.0
  %1880 = vmatprep.subr.mxu0 0.0
  %1881 = vmatpush2.msra.mxu0 0.0
  %1882 = vmatprep.subr.mxu0 0.0
  %1883 = vmatpush2.msra.mxu0 0.0
  %1884 = vmatprep.subr.mxu0 0.0
  %1885 = vmatpush2.msra.mxu0 0.0
  %1886 = vmatprep.subr.mxu0 0.0
  %1887 = vmatpush2.msra.mxu0 0.0
  %1888 = vmatprep.subr.mxu0 0.0
  %1889 = vmatpush2.msra.mxu0 0.0
  %1890 = vmatprep.subr.mxu0 0.0
  %1891 = vmatpush2.msra.mxu0 0.0
  %1892 = vmatprep.subr.mxu0 0.0
  %1893 = vmatpush2.msra.mxu0 0.0
  %1894 = vmatprep.subr.mxu0 0.0
  %1895 = vmatpush2.msra.mxu0 0.0
  %1896 = vmatprep.subr.mxu0 0.0
  %1897 = vmatpush2.msra.mxu0 0.0
  %1898 = vmatprep.subr.mxu0 0.0
  %1899 = vmatpush2.msra.mxu0 0.0
  %1900 = vmatprep.mubr.f32.mxu0 0.0
  %1901 = vmatmul.mubr.f32.gmra.mxu0 %v1834
  %v1902 = vpop.f32.mrf.mxu0
  %v1903 = vadd.f32 0.0, %v1902
  %v1904 = vpop.f32.mrf.mxu0
  %v1905 = vadd.f32 0.0, %v1904
  %1906 = vdwg.mxu0
  %v1909 = vrot.slane %v1903, 4
  %v1910 = vrot.slane %v1905, 4
  %v1913 = vadd.f32 %v1153, %v1909
  %v1914 = vadd.f32 %v1155, %v1910
  %v1915 = vxor.u32 %v1913, 2147483648
  %v1916 = vxor.u32 %v1914, 2147483648
  %v1917 = vmul.f32 %v1915, 1.442695
  %v1918 = vpow.pop %v1917
  %v1919 = vmul.f32 %v1916, 1.442695
  %v1920 = vpow.pop %v1919
  %v1921 = vadd.f32 %v1918, 1.0
  %v1922 = vadd.f32 %v1920, 1.0
  %v1923 = vrcp.pop %v1921
  %v1924 = vmul.f32 1.0, %v1923
  %v1925 = vrcp.pop %v1922
  %v1926 = vmul.f32 1.0, %v1925
  %v1927 = vtanh.pop %v1914
  %v1929 = vrot.slane %v1825, 6
  %v1931 = vmul.f32 %v1924, %v1929
  %1933 = vrot.lane.b32.xlu0 %v1927, 64
  %v1934 = vpop.permute.xlu0 %1933
  %v1936 = vmul.f32 %v1924, %v1934
  %1938 = vrot.lane.b32.xlu0 %v1936, 64
  %v1939 = vpop.permute.xlu0 %1938
  %v1941 = vadd.f32 %v1931, %v1939
  %v1942 = vtanh.pop %v1941
  %1944 = vrot.lane.b32.xlu0 %v1942, 64
  %v1945 = vpop.permute.xlu0 %1944
  %v1947 = vmul.f32 %v1926, %v1945
  %v1949 = vrot.slane %v1947, 4
  %v1950 = vsel %vm69, %v1949, 0
  %1952 = vmatprep.subr.mxu0 0.0
  %1953 = vmatpush1.msra.mxu0 0.0
  %1954 = vmatprep.subr.mxu0 0.0
  %1955 = vmatpush1.msra.mxu0 0.0
  %1956 = vmatprep.subr.mxu0 0.0
  %1957 = vmatpush1.msra.mxu0 0.0
  %1958 = vmatprep.subr.mxu0 0.0
  %1959 = vmatpush1.msra.mxu0 0.0
  %1960 = vmatprep.subr.mxu0 0.0
  %1961 = vmatpush1.msra.mxu0 0.0
  %1962 = vmatprep.subr.mxu0 0.0
  %1963 = vmatpush1.msra.mxu0 0.0
  %1964 = vmatprep.subr.mxu0 0.0
  %1965 = vmatpush1.msra.mxu0 0.0
  %1966 = vmatprep.subr.mxu0 0.0
  %1967 = vmatpush1.msra.mxu0 0.0
  %1968 = vmatprep.subr.mxu0 %v67
  %1969 = vmatpush1.msra.mxu0 %v66
  %1970 = vmatprep.subr.mxu0 %v65
  %1971 = vmatpush1.msra.mxu0 %v64
  %1972 = vmatprep.subr.mxu0 %v63
  %1973 = vmatpush1.msra.mxu0 %v62
  %1974 = vmatprep.subr.mxu0 %v61
  %1975 = vmatpush1.msra.mxu0 %v60
  %1976 = vmatprep.subr.mxu0 %v59
  %1977 = vmatpush1.msra.mxu0 %v58
  %1978 = vmatprep.subr.mxu0 %v57
  %1979 = vmatpush1.msra.mxu0 %v56
  %1980 = vmatprep.subr.mxu0 %v55
  %1981 = vmatpush1.msra.mxu0 %v54
  %1982 = vmatprep.subr.mxu0 %v53
  %1983 = vmatpush1.msra.mxu0 %v52
  %1984 = vmatprep.subr.mxu0 0.0
  %1985 = vmatpush2.msra.mxu0 0.0
  %1986 = vmatprep.subr.mxu0 0.0
  %1987 = vmatpush2.msra.mxu0 0.0
  %1988 = vmatprep.subr.mxu0 0.0
  %1989 = vmatpush2.msra.mxu0 0.0
  %1990 = vmatprep.subr.mxu0 0.0
  %1991 = vmatpush2.msra.mxu0 0.0
  %1992 = vmatprep.subr.mxu0 0.0
  %1993 = vmatpush2.msra.mxu0 0.0
  %1994 = vmatprep.subr.mxu0 0.0
  %1995 = vmatpush2.msra.mxu0 0.0
  %1996 = vmatprep.subr.mxu0 0.0
  %1997 = vmatpush2.msra.mxu0 0.0
  %1998 = vmatprep.subr.mxu0 0.0
  %1999 = vmatpush2.msra.mxu0 0.0
  %2000 = vmatprep.subr.mxu0 0.0
  %2001 = vmatpush2.msra.mxu0 0.0
  %2002 = vmatprep.subr.mxu0 0.0
  %2003 = vmatpush2.msra.mxu0 0.0
  %2004 = vmatprep.subr.mxu0 0.0
  %2005 = vmatpush2.msra.mxu0 0.0
  %2006 = vmatprep.subr.mxu0 0.0
  %2007 = vmatpush2.msra.mxu0 0.0
  %2008 = vmatprep.subr.mxu0 0.0
  %2009 = vmatpush2.msra.mxu0 0.0
  %2010 = vmatprep.subr.mxu0 0.0
  %2011 = vmatpush2.msra.mxu0 0.0
  %2012 = vmatprep.subr.mxu0 0.0
  %2013 = vmatpush2.msra.mxu0 0.0
  %2014 = vmatprep.subr.mxu0 0.0
  %2015 = vmatpush2.msra.mxu0 0.0
  %2016 = vmatprep.mubr.f32.mxu0 0.0
  %2017 = vmatmul.mubr.f32.gmra.mxu0 %v1950
  %v2018 = vpop.f32.mrf.mxu0
  %v2019 = vadd.f32 0.0, %v2018
  %v2020 = vpop.f32.mrf.mxu0
  %v2021 = vadd.f32 0.0, %v2020
  %2022 = vdwg.mxu0
  %v2025 = vrot.slane %v2019, 2
  %v2026 = vrot.slane %v2021, 2
  %v2029 = vadd.f32 %v1153, %v2025
  %v2030 = vadd.f32 %v1155, %v2026
  %v2031 = vxor.u32 %v2029, 2147483648
  %v2032 = vxor.u32 %v2030, 2147483648
  %v2033 = vmul.f32 %v2031, 1.442695
  %v2034 = vpow.pop %v2033
  %v2035 = vmul.f32 %v2032, 1.442695
  %v2036 = vpow.pop %v2035
  %v2037 = vadd.f32 %v2034, 1.0
  %v2038 = vadd.f32 %v2036, 1.0
  %v2039 = vrcp.pop %v2037
  %v2040 = vmul.f32 1.0, %v2039
  %v2041 = vrcp.pop %v2038
  %v2042 = vmul.f32 1.0, %v2041
  %v2043 = vtanh.pop %v2030
  %v2045 = vrot.slane %v1941, 6
  %v2047 = vmul.f32 %v2040, %v2045
  %2049 = vrot.lane.b32.xlu0 %v2043, 64
  %v2050 = vpop.permute.xlu0 %2049
  %v2052 = vmul.f32 %v2040, %v2050
  %2054 = vrot.lane.b32.xlu0 %v2052, 64
  %v2055 = vpop.permute.xlu0 %2054
  %v2057 = vadd.f32 %v2047, %v2055
  %v2058 = vtanh.pop %v2057
  %2060 = vrot.lane.b32.xlu0 %v2058, 64
  %v2061 = vpop.permute.xlu0 %2060
  %v2063 = vmul.f32 %v2042, %v2061
  %2064 = vrot.lane.b32.xlu0 %v1376, 64
  %v2065 = vpop.permute.xlu0 %2064
  %2068 = vrot.lane.b32.xlu0 %v1608, 64
  %v2069 = vpop.permute.xlu0 %2068
  %2071 = vrot.lane.b32.xlu0 %v1833, 64
  %v2072 = vpop.permute.xlu0 %2071
  %v2076 = vrot.slane %v2063, 6
  %2077 = vrot.lane.b32.xlu0 %v2076, 64
  %v2078 = vpop.permute.xlu0 %2077
  %v2080 = vsel %vm69, %v1259, %v2065
  %v2081 = vsel %vm69, %v1492, %v2069
  %v2082 = vsel %vm69, %v1716, %v2072
  %v2083 = vsel %vm69, %v1949, %v2078
  %v2088 = vcombine.low %v2080, %v2081
  %v2089 = vcombine.low %v2082, %v2083
  %v2091 = vunpack.c.l.s4 1983009808
  %v2092 = vunpack.c.0.s8 %v2091
  %v2093 = vlaneseq
  %v2094 = vshrl.u32 %v2093, 7
  %v2095 = vsub.s32 %v2092, %v2094
  %v2096 = vrot.slane %v2088, %v2095
  %v2098 = vunpack.c.l.s4 1983009808
  %v2099 = vunpack.c.0.s8 %v2098
  %v2100 = vlaneseq
  %v2101 = vshrl.u32 %v2100, 7
  %v2102 = vsub.s32 %v2099, %v2101
  %v2103 = vrot.slane %v2089, %v2102
  %v2104 = vcombine.low %v2096, %v2103
  %2106 = vst [vmem:[%s5] sm:$0xff] %v2104
  // Predicated region
  $region22: #{rnn_forward.1} parent=0 // pred_check
    _
  $region23: #{rnn_forward.1} parent=0 // pred_check_branch
    %2108 = sbr.rel (0) target = $region25
  $region24: #{rnn_forward.1} parent=0 // pred_region
    _
  $region25: #{rnn_forward.1} parent=0 // pred_fallthru
    _
  // Predicated region
  $region26: #{rnn_forward.1} parent=0 // pred_check
    _
  $region27: #{rnn_forward.1} parent=0 // pred_check_branch
    %2110 = sbr.rel (0) target = $region29
  $region28: #{rnn_forward.1} parent=0 // pred_region
    _
  $region29: #{rnn_forward.1} parent=0 // pred_fallthru
    _

</llo_original>
